<compile_context>
chip_gen: v5e
topology: v5e:2x2
jax: 0.10.0
libtpu: 0.0.40
codegen_flags: <defaults>
</compile_context>

<pallas_src>
import functools

import jax
import jax.numpy as jnp
from jax.experimental import pallas as pl
from jax.experimental.pallas import tpu as pltpu


def _round_up(a, b):
    return ((a + b - 1) // b) * b


def _text_embeddings_kernel(ids_ref, x_ref, tt_ref, pos_ref, xt_ref, yt_ref,
                            ht_ref, wt_ref, g_ref, b_ref, o_ref, sp_ref,
                            *, coord_size, shape_size, eps):
    """One tile of `tm` tokens: gathers + sum + LayerNorm, fully fused."""

    def gather(col, table_ref):
        # Row gather expressed as a one-hot matmul -> runs on the MXU.
        table = table_ref[...]
        n_rows = table.shape[0]
        ids = ids_ref[:, col:col + 1]                                  # (tm, 1)
        iota = jax.lax.broadcasted_iota(jnp.int32, (1, n_rows), 1)     # (1, n_rows)
        onehot = (ids == iota).astype(table.dtype)                     # (tm, n_rows)
        return jnp.dot(onehot, table, preferred_element_type=jnp.float32)

    c, s = coord_size, shape_size
    # Assemble the spatial embedding lane-dense into a VMEM scratch buffer.
    sp_ref[:, 0 * c:1 * c] = gather(2, xt_ref)               # left   (x0)
    sp_ref[:, 1 * c:2 * c] = gather(3, yt_ref)               # upper  (y0)
    sp_ref[:, 2 * c:3 * c] = gather(4, xt_ref)               # right  (x1)
    sp_ref[:, 3 * c:4 * c] = gather(5, yt_ref)               # lower  (y1)
    sp_ref[:, 4 * c:4 * c + s] = gather(6, ht_ref)           # height
    sp_ref[:, 4 * c + s:4 * c + 2 * s] = gather(7, wt_ref)   # width

    total = (x_ref[...].astype(jnp.float32)
             + gather(0, tt_ref)          # token-type embedding
             + gather(1, pos_ref)         # position embedding
             + sp_ref[...])

    # LayerNorm over the hidden (lane) axis, f32.
    mean = jnp.mean(total, axis=-1, keepdims=True)
    centered = total - mean
    var = jnp.mean(centered * centered, axis=-1, keepdims=True)
    inv = jax.lax.rsqrt(var + eps)
    y = centered * inv * g_ref[...].astype(jnp.float32) + b_ref[...].astype(jnp.float32)
    # TODO(synk): dropout is identity in eval mode; training-mode dropout would
    # use pltpu.prng_seed / pltpu.prng_random_bits here.
    o_ref[...] = y.astype(o_ref.dtype)


@functools.partial(jax.jit,
                   static_argnames=("pad_token_id", "layer_norm_eps", "tm"))
def layoutlmv3_text_embeddings(input_ids, bbox, params, *,
                               token_type_ids=None, position_ids=None,
                               reverse_position_ids=None, page_position_ids=None,
                               pad_token_id=1, layer_norm_eps=1e-5, tm=256):
    """input_ids: (B, S) int32; bbox: (B, S, 4) int32 with values in [0, 1000]."""
    B, S = input_ids.shape
    word_tbl = params["word_embeddings"]          # (V, H)
    tt_tbl = params["token_type_embeddings"]      # (T, H)
    pos_tbl = params["position_embeddings"]       # (P, H)
    x_tbl = params["x_position_embeddings"]       # (1024, C)
    y_tbl = params["y_position_embeddings"]       # (1024, C)
    h_tbl = params["h_position_embeddings"]       # (1024, Sh)
    w_tbl = params["w_position_embeddings"]       # (1024, Sh)
    gamma = params["ln_weight"]
    beta = params["ln_bias"]

    H = word_tbl.shape[1]
    C = x_tbl.shape[1]
    Sh = h_tbl.shape[1]
    assert 4 * C + 2 * Sh == H, "spatial embedding widths must sum to hidden_size"

    if position_ids is None:
        mask = (input_ids != pad_token_id).astype(jnp.int32)
        position_ids = jnp.cumsum(mask, axis=1) * mask + pad_token_id
    if token_type_ids is None:
        token_type_ids = jnp.zeros((B, S), dtype=jnp.int32)

    # TODO(synk): the vocab-sized word-embedding gather stays an XLA gather
    # (table >> VMEM, data-dependent rows); the kernel consumes the gathered rows.
    inputs_embeds = jnp.take(word_tbl, input_ids, axis=0)           # (B, S, H)

    # Optional LayoutLMv3 extras (config-gated in the PyTorch module): folded
    # into the dense embedding input when enabled.
    if params.get("reverse_position_embeddings") is not None and reverse_position_ids is not None:
        inputs_embeds = inputs_embeds + jnp.take(
            params["reverse_position_embeddings"], reverse_position_ids, axis=0)
    if params.get("page_position_embeddings") is not None and page_position_ids is not None:
        inputs_embeds = inputs_embeds + jnp.take(
            params["page_position_embeddings"], page_position_ids, axis=0)

    bbox = bbox.astype(jnp.int32)
    hh = jnp.clip(bbox[..., 3] - bbox[..., 1], 0, 1023)
    ww = jnp.clip(bbox[..., 2] - bbox[..., 0], 0, 1023)
    ids = jnp.stack(
        [token_type_ids.astype(jnp.int32), position_ids.astype(jnp.int32),
         bbox[..., 0], bbox[..., 1], bbox[..., 2], bbox[..., 3], hh, ww],
        axis=-1).reshape(B * S, 8)

    # Avoid a degenerate K=2 matmul for the token-type table: pad rows to >= 8.
    if tt_tbl.shape[0] < 8:
        tt_tbl = jnp.pad(tt_tbl, ((0, 8 - tt_tbl.shape[0]), (0, 0)))

    M = B * S
    x2d = inputs_embeds.reshape(M, H)

    tm_eff = min(tm, _round_up(M, 8))
    m_pad = _round_up(M, tm_eff)
    if m_pad != M:
        x2d = jnp.pad(x2d, ((0, m_pad - M), (0, 0)))
        ids = jnp.pad(ids, ((0, m_pad - M), (0, 0)))

    kernel = functools.partial(_text_embeddings_kernel,
                               coord_size=C, shape_size=Sh,
                               eps=float(layer_norm_eps))

    def full(shape):
        # Whole-array block, constant index_map -> resident in VMEM across grid.
        return pl.BlockSpec(tuple(shape), lambda i: (0, 0))

    out2d = pl.pallas_call(
        kernel,
        out_shape=jax.ShapeDtypeStruct((m_pad, H), inputs_embeds.dtype),
        grid_spec=pltpu.PrefetchScalarGridSpec(
            num_scalar_prefetch=0,
            grid=(m_pad // tm_eff,),
            in_specs=[
                pl.BlockSpec((tm_eff, 8), lambda i: (i, 0)),   # per-token ids
                pl.BlockSpec((tm_eff, H), lambda i: (i, 0)),   # gathered word embeds
                full(tt_tbl.shape),                            # token-type table
                full(pos_tbl.shape),                           # position table
                full(x_tbl.shape),                             # x table
                full(y_tbl.shape),                             # y table
                full(h_tbl.shape),                             # h table
                full(w_tbl.shape),                             # w table
                full((1, H)),                                  # LayerNorm weight
                full((1, H)),                                  # LayerNorm bias
            ],
            out_specs=pl.BlockSpec((tm_eff, H), lambda i: (i, 0)),
            scratch_shapes=[pltpu.VMEM((tm_eff, H), jnp.float32)],
        ),
        compiler_params=pltpu.CompilerParams(
            dimension_semantics=("parallel",)),
    )(ids, x2d, tt_tbl, pos_tbl, x_tbl, y_tbl, h_tbl, w_tbl,
      gamma.reshape(1, H), beta.reshape(1, H))

    return out2d[:M].reshape(B, S, H)


if __name__ == "__main__":
    # Small synthetic config consistent with the module:
    # hidden_size = 4 * coordinate_size + 2 * shape_size.
    batch, seq = 2, 8
    vocab_size, type_vocab_size = 100, 2
    hidden_size = 48
    coordinate_size, shape_size = 8, 8
    max_position_embeddings = 32
    max_2d_position_embeddings = 1024
    pad_token_id = 1
    layer_norm_eps = 1e-5

    key = jax.random.PRNGKey(0)
    keys = jax.random.split(key, 12)

    def init(k, shape, scale=0.02):
        return (scale * jax.random.normal(k, shape)).astype(jnp.float32)

    word_tbl = init(keys[0], (vocab_size, hidden_size))
    word_tbl = word_tbl.at[pad_token_id].set(0.0)      # nn.Embedding padding_idx init
    tt_tbl = init(keys[1], (type_vocab_size, hidden_size))
    pos_tbl = init(keys[2], (max_position_embeddings, hidden_size))
    pos_tbl = pos_tbl.at[pad_token_id].set(0.0)
    x_tbl = init(keys[3], (max_2d_position_embeddings, coordinate_size))
    y_tbl = init(keys[4], (max_2d_position_embeddings, coordinate_size))
    h_tbl = init(keys[5], (max_2d_position_embeddings, shape_size))
    w_tbl = init(keys[6], (max_2d_position_embeddings, shape_size))
    gamma = jnp.ones((hidden_size,), jnp.float32)
    beta = jnp.zeros((hidden_size,), jnp.float32)

    params = dict(word_embeddings=word_tbl, token_type_embeddings=tt_tbl,
                  position_embeddings=pos_tbl, x_position_embeddings=x_tbl,
                  y_position_embeddings=y_tbl, h_position_embeddings=h_tbl,
                  w_position_embeddings=w_tbl, ln_weight=gamma, ln_bias=beta)

    input_ids = jax.random.randint(keys[7], (batch, seq), 0, vocab_size, dtype=jnp.int32)
    input_ids = input_ids.at[:, -1].set(pad_token_id)   # exercise padding logic

    x0 = jax.random.randint(keys[8], (batch, seq), 0, 500, dtype=jnp.int32)
    y0 = jax.random.randint(keys[9], (batch, seq), 0, 500, dtype=jnp.int32)
    x1 = x0 + jax.random.randint(keys[10], (batch, seq), 0, 500, dtype=jnp.int32)
    y1 = y0 + jax.random.randint(keys[11], (batch, seq), 0, 500, dtype=jnp.int32)
    bbox = jnp.stack([x0, y0, x1, y1], axis=-1)

    out = layoutlmv3_text_embeddings(
        input_ids, bbox, params,
        pad_token_id=pad_token_id, layer_norm_eps=layer_norm_eps)
    out = jax.block_until_ready(out)

    # Pure-JAX reference mirroring the PyTorch forward (dropout in eval = id).
    mask = (input_ids != pad_token_id).astype(jnp.int32)
    position_ids = jnp.cumsum(mask, axis=1) * mask + pad_token_id
    emb = (word_tbl[input_ids]
           + tt_tbl[jnp.zeros_like(input_ids)]
           + pos_tbl[position_ids])
    spatial = jnp.concatenate(
        [x_tbl[bbox[..., 0]], y_tbl[bbox[..., 1]],
         x_tbl[bbox[..., 2]], y_tbl[bbox[..., 3]],
         h_tbl[jnp.clip(bbox[..., 3] - bbox[..., 1], 0, 1023)],
         w_tbl[jnp.clip(bbox[..., 2] - bbox[..., 0], 0, 1023)]], axis=-1)
    total = emb + spatial
    mu = total.mean(-1, keepdims=True)
    var = ((total - mu) ** 2).mean(-1, keepdims=True)
    ref = (total - mu) * jax.lax.rsqrt(var + layer_norm_eps) * gamma + beta

    assert out.shape == (batch, seq, hidden_size)
    err = float(jnp.max(jnp.abs(out - ref)))
    assert jnp.allclose(out, ref, atol=1e-5, rtol=1e-5), err

    print("KERNEL_OK")
</pallas_src>

<mosaic_0001>
module attributes {stable_mosaic.version = 11 : i64} {
  func.func @_text_embeddings_kernel(%arg0: i32, %arg1: memref<16x8xi32, #tpu.memory_space<vmem>>, %arg2: memref<16x48xf32, #tpu.memory_space<vmem>>, %arg3: memref<8x48xf32, #tpu.memory_space<vmem>>, %arg4: memref<32x48xf32, #tpu.memory_space<vmem>>, %arg5: memref<1024x8xf32, #tpu.memory_space<vmem>>, %arg6: memref<1024x8xf32, #tpu.memory_space<vmem>>, %arg7: memref<1024x8xf32, #tpu.memory_space<vmem>>, %arg8: memref<1024x8xf32, #tpu.memory_space<vmem>>, %arg9: memref<1x48xf32, #tpu.memory_space<vmem>>, %arg10: memref<1x48xf32, #tpu.memory_space<vmem>>, %arg11: memref<16x48xf32, #tpu.memory_space<vmem>>, %arg12: memref<16x48xf32, #tpu.memory_space<vmem>>) attributes {dimension_semantics = [#tpu.dimension_semantics<parallel>], iteration_bounds = array<i64: 1>, scalar_prefetch = 0 : i64, scratch_operands = 1 : i64, tpu.core_type = #tpu.core_type<tc>, window_params = [{transform_indices = @transform_0, window_bounds = array<i64: 16, 8>}, {transform_indices = @transform_1, window_bounds = array<i64: 16, 48>}, {pipeline_mode = #tpu.pipeline_mode<synchronous>, transform_indices = @transform_2, window_bounds = array<i64: 8, 48>}, {pipeline_mode = #tpu.pipeline_mode<synchronous>, transform_indices = @transform_3, window_bounds = array<i64: 32, 48>}, {pipeline_mode = #tpu.pipeline_mode<synchronous>, transform_indices = @transform_4, window_bounds = array<i64: 1024, 8>}, {pipeline_mode = #tpu.pipeline_mode<synchronous>, transform_indices = @transform_5, window_bounds = array<i64: 1024, 8>}, {pipeline_mode = #tpu.pipeline_mode<synchronous>, transform_indices = @transform_6, window_bounds = array<i64: 1024, 8>}, {pipeline_mode = #tpu.pipeline_mode<synchronous>, transform_indices = @transform_7, window_bounds = array<i64: 1024, 8>}, {pipeline_mode = #tpu.pipeline_mode<synchronous>, transform_indices = @transform_8, window_bounds = array<i64: 1, 48>}, {pipeline_mode = #tpu.pipeline_mode<synchronous>, transform_indices = @transform_9, window_bounds = array<i64: 1, 48>}, {transform_indices = @transform_10, window_bounds = array<i64: 16, 48>}]} {
    %c0 = arith.constant 0 : index
    %c0_0 = arith.constant 0 : index
    %0 = vector.load %arg5[%c0, %c0_0] : memref<1024x8xf32, #tpu.memory_space<vmem>>, vector<1024x8xf32>
    %c0_1 = arith.constant 0 : index
    %c2 = arith.constant 2 : index
    %1 = vector.load %arg1[%c0_1, %c2] : memref<16x8xi32, #tpu.memory_space<vmem>>, vector<16x1xi32>
    %2 = tpu.iota {dimensions = array<i32: 1>} : vector<1x1024xi32>
    %3 = vector.broadcast %1 : vector<16x1xi32> to vector<16x1024xi32>
    %4 = vector.broadcast %2 : vector<1x1024xi32> to vector<16x1024xi32>
    %5 = arith.cmpi eq, %3, %4 : vector<16x1024xi32>
    %6 = arith.extui %5 : vector<16x1024xi1> to vector<16x1024xi32>
    %7 = arith.sitofp %6 : vector<16x1024xi32> to vector<16x1024xf32>
    %cst = arith.constant dense<0.000000e+00> : vector<16x8xf32>
    %8 = tpu.matmul %7, %0, %cst {dimension_numbers = #tpu.dot_dimension_numbers<[1], [0], [0], [1], [0, 0, 1, 1], [], []>} : vector<16x1024xf32>, vector<1024x8xf32>, vector<16x8xf32> -> vector<16x8xf32>
    %c0_2 = arith.constant 0 : index
    %c0_3 = arith.constant 0 : index
    %9 = vector.load %arg12[%c0_2, %c0_3] : memref<16x48xf32, #tpu.memory_space<vmem>>, vector<16x8xf32>
    tpu.vector_store %arg12[%c0_2, %c0_3], %8 {strides = array<i32>} : memref<16x48xf32, #tpu.memory_space<vmem>>, vector<16x8xf32>,
    %c0_4 = arith.constant 0 : index
    %c0_5 = arith.constant 0 : index
    %10 = vector.load %arg6[%c0_4, %c0_5] : memref<1024x8xf32, #tpu.memory_space<vmem>>, vector<1024x8xf32>
    %c0_6 = arith.constant 0 : index
    %c3 = arith.constant 3 : index
    %11 = vector.load %arg1[%c0_6, %c3] : memref<16x8xi32, #tpu.memory_space<vmem>>, vector<16x1xi32>
    %12 = tpu.iota {dimensions = array<i32: 1>} : vector<1x1024xi32>
    %13 = vector.broadcast %11 : vector<16x1xi32> to vector<16x1024xi32>
    %14 = vector.broadcast %12 : vector<1x1024xi32> to vector<16x1024xi32>
    %15 = arith.cmpi eq, %13, %14 : vector<16x1024xi32>
    %16 = arith.extui %15 : vector<16x1024xi1> to vector<16x1024xi32>
    %17 = arith.sitofp %16 : vector<16x1024xi32> to vector<16x1024xf32>
    %cst_7 = arith.constant dense<0.000000e+00> : vector<16x8xf32>
    %18 = tpu.matmul %17, %10, %cst_7 {dimension_numbers = #tpu.dot_dimension_numbers<[1], [0], [0], [1], [0, 0, 1, 1], [], []>} : vector<16x1024xf32>, vector<1024x8xf32>, vector<16x8xf32> -> vector<16x8xf32>
    %c0_8 = arith.constant 0 : index
    %c8 = arith.constant 8 : index
    %19 = vector.load %arg12[%c0_8, %c8] : memref<16x48xf32, #tpu.memory_space<vmem>>, vector<16x8xf32>
    tpu.vector_store %arg12[%c0_8, %c8], %18 {strides = array<i32>} : memref<16x48xf32, #tpu.memory_space<vmem>>, vector<16x8xf32>,
    %c0_9 = arith.constant 0 : index
    %c0_10 = arith.constant 0 : index
    %20 = vector.load %arg5[%c0_9, %c0_10] : memref<1024x8xf32, #tpu.memory_space<vmem>>, vector<1024x8xf32>
    %c0_11 = arith.constant 0 : index
    %c4 = arith.constant 4 : index
    %21 = vector.load %arg1[%c0_11, %c4] : memref<16x8xi32, #tpu.memory_space<vmem>>, vector<16x1xi32>
    %22 = tpu.iota {dimensions = array<i32: 1>} : vector<1x1024xi32>
    %23 = vector.broadcast %21 : vector<16x1xi32> to vector<16x1024xi32>
    %24 = vector.broadcast %22 : vector<1x1024xi32> to vector<16x1024xi32>
    %25 = arith.cmpi eq, %23, %24 : vector<16x1024xi32>
    %26 = arith.extui %25 : vector<16x1024xi1> to vector<16x1024xi32>
    %27 = arith.sitofp %26 : vector<16x1024xi32> to vector<16x1024xf32>
    %cst_12 = arith.constant dense<0.000000e+00> : vector<16x8xf32>
    %28 = tpu.matmul %27, %20, %cst_12 {dimension_numbers = #tpu.dot_dimension_numbers<[1], [0], [0], [1], [0, 0, 1, 1], [], []>} : vector<16x1024xf32>, vector<1024x8xf32>, vector<16x8xf32> -> vector<16x8xf32>
    %c0_13 = arith.constant 0 : index
    %c16 = arith.constant 16 : index
    %29 = vector.load %arg12[%c0_13, %c16] : memref<16x48xf32, #tpu.memory_space<vmem>>, vector<16x8xf32>
    tpu.vector_store %arg12[%c0_13, %c16], %28 {strides = array<i32>} : memref<16x48xf32, #tpu.memory_space<vmem>>, vector<16x8xf32>,
    %c0_14 = arith.constant 0 : index
    %c0_15 = arith.constant 0 : index
    %30 = vector.load %arg6[%c0_14, %c0_15] : memref<1024x8xf32, #tpu.memory_space<vmem>>, vector<1024x8xf32>
    %c0_16 = arith.constant 0 : index
    %c5 = arith.constant 5 : index
    %31 = vector.load %arg1[%c0_16, %c5] : memref<16x8xi32, #tpu.memory_space<vmem>>, vector<16x1xi32>
    %32 = tpu.iota {dimensions = array<i32: 1>} : vector<1x1024xi32>
    %33 = vector.broadcast %31 : vector<16x1xi32> to vector<16x1024xi32>
    %34 = vector.broadcast %32 : vector<1x1024xi32> to vector<16x1024xi32>
    %35 = arith.cmpi eq, %33, %34 : vector<16x1024xi32>
    %36 = arith.extui %35 : vector<16x1024xi1> to vector<16x1024xi32>
    %37 = arith.sitofp %36 : vector<16x1024xi32> to vector<16x1024xf32>
    %cst_17 = arith.constant dense<0.000000e+00> : vector<16x8xf32>
    %38 = tpu.matmul %37, %30, %cst_17 {dimension_numbers = #tpu.dot_dimension_numbers<[1], [0], [0], [1], [0, 0, 1, 1], [], []>} : vector<16x1024xf32>, vector<1024x8xf32>, vector<16x8xf32> -> vector<16x8xf32>
    %c0_18 = arith.constant 0 : index
    %c24 = arith.constant 24 : index
    %39 = vector.load %arg12[%c0_18, %c24] : memref<16x48xf32, #tpu.memory_space<vmem>>, vector<16x8xf32>
    tpu.vector_store %arg12[%c0_18, %c24], %38 {strides = array<i32>} : memref<16x48xf32, #tpu.memory_space<vmem>>, vector<16x8xf32>,
    %c0_19 = arith.constant 0 : index
    %c0_20 = arith.constant 0 : index
    %40 = vector.load %arg7[%c0_19, %c0_20] : memref<1024x8xf32, #tpu.memory_space<vmem>>, vector<1024x8xf32>
    %c0_21 = arith.constant 0 : index
    %c6 = arith.constant 6 : index
    %41 = vector.load %arg1[%c0_21, %c6] : memref<16x8xi32, #tpu.memory_space<vmem>>, vector<16x1xi32>
    %42 = tpu.iota {dimensions = array<i32: 1>} : vector<1x1024xi32>
    %43 = vector.broadcast %41 : vector<16x1xi32> to vector<16x1024xi32>
    %44 = vector.broadcast %42 : vector<1x1024xi32> to vector<16x1024xi32>
    %45 = arith.cmpi eq, %43, %44 : vector<16x1024xi32>
    %46 = arith.extui %45 : vector<16x1024xi1> to vector<16x1024xi32>
    %47 = arith.sitofp %46 : vector<16x1024xi32> to vector<16x1024xf32>
    %cst_22 = arith.constant dense<0.000000e+00> : vector<16x8xf32>
    %48 = tpu.matmul %47, %40, %cst_22 {dimension_numbers = #tpu.dot_dimension_numbers<[1], [0], [0], [1], [0, 0, 1, 1], [], []>} : vector<16x1024xf32>, vector<1024x8xf32>, vector<16x8xf32> -> vector<16x8xf32>
    %c0_23 = arith.constant 0 : index
    %c32 = arith.constant 32 : index
    %49 = vector.load %arg12[%c0_23, %c32] : memref<16x48xf32, #tpu.memory_space<vmem>>, vector<16x8xf32>
    tpu.vector_store %arg12[%c0_23, %c32], %48 {strides = array<i32>} : memref<16x48xf32, #tpu.memory_space<vmem>>, vector<16x8xf32>,
    %c0_24 = arith.constant 0 : index
    %c0_25 = arith.constant 0 : index
    %50 = vector.load %arg8[%c0_24, %c0_25] : memref<1024x8xf32, #tpu.memory_space<vmem>>, vector<1024x8xf32>
    %c0_26 = arith.constant 0 : index
    %c7 = arith.constant 7 : index
    %51 = vector.load %arg1[%c0_26, %c7] : memref<16x8xi32, #tpu.memory_space<vmem>>, vector<16x1xi32>
    %52 = tpu.iota {dimensions = array<i32: 1>} : vector<1x1024xi32>
    %53 = vector.broadcast %51 : vector<16x1xi32> to vector<16x1024xi32>
    %54 = vector.broadcast %52 : vector<1x1024xi32> to vector<16x1024xi32>
    %55 = arith.cmpi eq, %53, %54 : vector<16x1024xi32>
    %56 = arith.extui %55 : vector<16x1024xi1> to vector<16x1024xi32>
    %57 = arith.sitofp %56 : vector<16x1024xi32> to vector<16x1024xf32>
    %cst_27 = arith.constant dense<0.000000e+00> : vector<16x8xf32>
    %58 = tpu.matmul %57, %50, %cst_27 {dimension_numbers = #tpu.dot_dimension_numbers<[1], [0], [0], [1], [0, 0, 1, 1], [], []>} : vector<16x1024xf32>, vector<1024x8xf32>, vector<16x8xf32> -> vector<16x8xf32>
    %c0_28 = arith.constant 0 : index
    %c40 = arith.constant 40 : index
    %59 = vector.load %arg12[%c0_28, %c40] : memref<16x48xf32, #tpu.memory_space<vmem>>, vector<16x8xf32>
    tpu.vector_store %arg12[%c0_28, %c40], %58 {strides = array<i32>} : memref<16x48xf32, #tpu.memory_space<vmem>>, vector<16x8xf32>,
    %c0_29 = arith.constant 0 : index
    %c0_30 = arith.constant 0 : index
    %60 = vector.load %arg2[%c0_29, %c0_30] : memref<16x48xf32, #tpu.memory_space<vmem>>, vector<16x48xf32>
    %c0_31 = arith.constant 0 : index
    %c0_32 = arith.constant 0 : index
    %61 = vector.load %arg3[%c0_31, %c0_32] : memref<8x48xf32, #tpu.memory_space<vmem>>, vector<8x48xf32>
    %c0_33 = arith.constant 0 : index
    %c0_34 = arith.constant 0 : index
    %62 = vector.load %arg1[%c0_33, %c0_34] : memref<16x8xi32, #tpu.memory_space<vmem>>, vector<16x1xi32>
    %63 = tpu.iota {dimensions = array<i32: 1>} : vector<1x8xi32>
    %64 = vector.broadcast %62 : vector<16x1xi32> to vector<16x8xi32>
    %65 = vector.broadcast %63 : vector<1x8xi32> to vector<16x8xi32>
    %66 = arith.cmpi eq, %64, %65 : vector<16x8xi32>
    %67 = arith.extui %66 : vector<16x8xi1> to vector<16x8xi32>
    %68 = arith.sitofp %67 : vector<16x8xi32> to vector<16x8xf32>
    %cst_35 = arith.constant dense<0.000000e+00> : vector<16x48xf32>
    %69 = tpu.matmul %68, %61, %cst_35 {dimension_numbers = #tpu.dot_dimension_numbers<[1], [0], [0], [1], [0, 0, 1, 1], [], []>} : vector<16x8xf32>, vector<8x48xf32>, vector<16x48xf32> -> vector<16x48xf32>
    %70 = arith.addf %60, %69 : vector<16x48xf32>
    %c0_36 = arith.constant 0 : index
    %c0_37 = arith.constant 0 : index
    %71 = vector.load %arg4[%c0_36, %c0_37] : memref<32x48xf32, #tpu.memory_space<vmem>>, vector<32x48xf32>
    %c0_38 = arith.constant 0 : index
    %c1 = arith.constant 1 : index
    %72 = vector.load %arg1[%c0_38, %c1] : memref<16x8xi32, #tpu.memory_space<vmem>>, vector<16x1xi32>
    %73 = tpu.iota {dimensions = array<i32: 1>} : vector<1x32xi32>
    %74 = vector.broadcast %72 : vector<16x1xi32> to vector<16x32xi32>
    %75 = vector.broadcast %73 : vector<1x32xi32> to vector<16x32xi32>
    %76 = arith.cmpi eq, %74, %75 : vector<16x32xi32>
    %77 = arith.extui %76 : vector<16x32xi1> to vector<16x32xi32>
    %78 = arith.sitofp %77 : vector<16x32xi32> to vector<16x32xf32>
    %cst_39 = arith.constant dense<0.000000e+00> : vector<16x48xf32>
    %79 = tpu.matmul %78, %71, %cst_39 {dimension_numbers = #tpu.dot_dimension_numbers<[1], [0], [0], [1], [0, 0, 1, 1], [], []>} : vector<16x32xf32>, vector<32x48xf32>, vector<16x48xf32> -> vector<16x48xf32>
    %80 = arith.addf %70, %79 : vector<16x48xf32>
    %c0_40 = arith.constant 0 : index
    %c0_41 = arith.constant 0 : index
    %81 = vector.load %arg12[%c0_40, %c0_41] : memref<16x48xf32, #tpu.memory_space<vmem>>, vector<16x48xf32>
    %82 = arith.addf %80, %81 : vector<16x48xf32>
    %cst_42 = arith.constant dense<0.000000e+00> : vector<16xf32>
    %83 = vector.multi_reduction <add>, %82, %cst_42 [1] : vector<16x48xf32> to vector<16xf32>
    %84 = vector.shape_cast %83 : vector<16xf32> to vector<16x1xf32>
    %cst_43 = arith.constant 4.800000e+01 : f32
    %85 = vector.broadcast %cst_43 : f32 to vector<16x1xf32>
    %86 = arith.divf %84, %85 : vector<16x1xf32>
    %87 = vector.broadcast %86 : vector<16x1xf32> to vector<16x48xf32>
    %88 = arith.subf %82, %87 : vector<16x48xf32>
    %89 = arith.mulf %88, %88 : vector<16x48xf32>
    %cst_44 = arith.constant dense<0.000000e+00> : vector<16xf32>
    %90 = vector.multi_reduction <add>, %89, %cst_44 [1] : vector<16x48xf32> to vector<16xf32>
    %91 = vector.shape_cast %90 : vector<16xf32> to vector<16x1xf32>
    %cst_45 = arith.constant 4.800000e+01 : f32
    %92 = vector.broadcast %cst_45 : f32 to vector<16x1xf32>
    %93 = arith.divf %91, %92 : vector<16x1xf32>
    %cst_46 = arith.constant 9.99999974E-6 : f32
    %94 = vector.broadcast %cst_46 : f32 to vector<16x1xf32>
    %95 = arith.addf %93, %94 : vector<16x1xf32>
    %96 = math.rsqrt %95 : vector<16x1xf32>
    %97 = vector.broadcast %96 : vector<16x1xf32> to vector<16x48xf32>
    %98 = arith.mulf %88, %97 : vector<16x48xf32>
    %c0_47 = arith.constant 0 : index
    %c0_48 = arith.constant 0 : index
    %99 = vector.load %arg9[%c0_47, %c0_48] : memref<1x48xf32, #tpu.memory_space<vmem>>, vector<1x48xf32>
    %100 = vector.broadcast %99 : vector<1x48xf32> to vector<16x48xf32>
    %101 = arith.mulf %98, %100 : vector<16x48xf32>
    %c0_49 = arith.constant 0 : index
    %c0_50 = arith.constant 0 : index
    %102 = vector.load %arg10[%c0_49, %c0_50] : memref<1x48xf32, #tpu.memory_space<vmem>>, vector<1x48xf32>
    %103 = vector.broadcast %102 : vector<1x48xf32> to vector<16x48xf32>
    %104 = arith.addf %101, %103 : vector<16x48xf32>
    %c0_51 = arith.constant 0 : index
    %c0_52 = arith.constant 0 : index
    %105 = vector.load %arg11[%c0_51, %c0_52] : memref<16x48xf32, #tpu.memory_space<vmem>>, vector<16x48xf32>
    tpu.vector_store %arg11[%c0_51, %c0_52], %104 {strides = array<i32>} : memref<16x48xf32, #tpu.memory_space<vmem>>, vector<16x48xf32>,
    return
  }
  func.func @transform_0(%arg0: i32) -> (i32, i32) {
    %c0_i32 = arith.constant 0 : i32
    %c0_i32_0 = arith.constant 0 : i32
    return %arg0, %c0_i32 : i32, i32
  }
  func.func @transform_1(%arg0: i32) -> (i32, i32) {
    %c0_i32 = arith.constant 0 : i32
    %c0_i32_0 = arith.constant 0 : i32
    return %arg0, %c0_i32 : i32, i32
  }
  func.func @transform_2(%arg0: i32) -> (i32, i32) {
    %c0_i32 = arith.constant 0 : i32
    %c0_i32_0 = arith.constant 0 : i32
    %c0_i32_1 = arith.constant 0 : i32
    return %c0_i32, %c0_i32_0 : i32, i32
  }
  func.func @transform_3(%arg0: i32) -> (i32, i32) {
    %c0_i32 = arith.constant 0 : i32
    %c0_i32_0 = arith.constant 0 : i32
    %c0_i32_1 = arith.constant 0 : i32
    return %c0_i32, %c0_i32_0 : i32, i32
  }
  func.func @transform_4(%arg0: i32) -> (i32, i32) {
    %c0_i32 = arith.constant 0 : i32
    %c0_i32_0 = arith.constant 0 : i32
    %c0_i32_1 = arith.constant 0 : i32
    return %c0_i32, %c0_i32_0 : i32, i32
  }
  func.func @transform_5(%arg0: i32) -> (i32, i32) {
    %c0_i32 = arith.constant 0 : i32
    %c0_i32_0 = arith.constant 0 : i32
    %c0_i32_1 = arith.constant 0 : i32
    return %c0_i32, %c0_i32_0 : i32, i32
  }
  func.func @transform_6(%arg0: i32) -> (i32, i32) {
    %c0_i32 = arith.constant 0 : i32
    %c0_i32_0 = arith.constant 0 : i32
    %c0_i32_1 = arith.constant 0 : i32
    return %c0_i32, %c0_i32_0 : i32, i32
  }
  func.func @transform_7(%arg0: i32) -> (i32, i32) {
    %c0_i32 = arith.constant 0 : i32
    %c0_i32_0 = arith.constant 0 : i32
    %c0_i32_1 = arith.constant 0 : i32
    return %c0_i32, %c0_i32_0 : i32, i32
  }
  func.func @transform_8(%arg0: i32) -> (i32, i32) {
    %c0_i32 = arith.constant 0 : i32
    %c0_i32_0 = arith.constant 0 : i32
    %c0_i32_1 = arith.constant 0 : i32
    return %c0_i32, %c0_i32_0 : i32, i32
  }
  func.func @transform_9(%arg0: i32) -> (i32, i32) {
    %c0_i32 = arith.constant 0 : i32
    %c0_i32_0 = arith.constant 0 : i32
    %c0_i32_1 = arith.constant 0 : i32
    return %c0_i32, %c0_i32_0 : i32, i32
  }
  func.func @transform_10(%arg0: i32) -> (i32, i32) {
    %c0_i32 = arith.constant 0 : i32
    %c0_i32_0 = arith.constant 0 : i32
    return %arg0, %c0_i32 : i32, i32
  }
}

</mosaic_0001>

<llo_original>
// kernel: layoutlmv3_text_embeddings.1
$region0: #{layoutlmv3_text_embeddings.1}
  #allocation0 [shape = 'u32[]', space=smem, size = 0x4, offset = 0x4, fixed_abs, tag = 'smem constant byte address 0x4 - core index']
  #allocation1 [shape = 'u32[72,128]{1,0:T(1,128)}', space=vmem, size = 0x9000, scoped, tag = 'internal scratch']
  #allocation2 [shape = 'f32[16,48]{1,0:T(8,128)}', space=vmem, size = 0x2000, scoped, tag = 'scratch operand']
  %s0 = inlined_call_operand.vmem [shape: s32[16,8], index: 0, kind: input, shape index: {}]
  %s1 = inlined_call_operand.vmem [shape: f32[16,48], index: 1, kind: input, shape index: {}]
  %s2 = inlined_call_operand.vmem [shape: f32[8,48], index: 2, kind: input, shape index: {}]
  %s3 = inlined_call_operand.vmem [shape: f32[32,48], index: 3, kind: input, shape index: {}]
  %s4 = inlined_call_operand.vmem [shape: f32[1024,8], index: 4, kind: input, shape index: {}]
  %s5 = inlined_call_operand.vmem [shape: f32[1024,8], index: 5, kind: input, shape index: {}]
  %s6 = inlined_call_operand.vmem [shape: f32[1024,8], index: 6, kind: input, shape index: {}]
  %s7 = inlined_call_operand.vmem [shape: f32[1024,8], index: 7, kind: input, shape index: {}]
  %s8 = inlined_call_operand.vmem [shape: f32[1,48], index: 8, kind: input, shape index: {}]
  %s9 = inlined_call_operand.vmem [shape: f32[1,48], index: 9, kind: input, shape index: {}]
  %s10 = inlined_call_operand.hbm [shape: f32[16,48], index: 10, kind: output, shape index: {}]
  %s11 = sld [smem:[#allocation0]]
  $region50: #{layoutlmv3_text_embeddings.1} parent=0
    _
  %s13 = ssub.s32 1, %s11
  %s14 = scalar_select 0, %s13, %s11
  $region1: #{layoutlmv3_text_embeddings.1} parent=0
    #allocation3 [shape = 'u8[8192]{0}', space=vmem, size = 0x2000, scoped, tag = 'output window, operand 0, single buffered']
    #allocation4 [shape = 's32[1]{0}', space=sflag, size = 0x4, scoped, tag = 'scoped memory for layoutlmv3_text_embeddings.1']
    %15 = vsyncpa [#allocation4], 0
    // Predicated region
    $region2: #{layoutlmv3_text_embeddings.1} parent=1 // pred_check
      _
    $region3: #{layoutlmv3_text_embeddings.1} parent=1 // pred_check_branch
      %17 = sbr.rel (0) target = $region5
    $region4: #{layoutlmv3_text_embeddings.1} parent=1 // pred_region
      _
    $region5: #{layoutlmv3_text_embeddings.1} parent=1 // pred_fallthru
      _
    // Predicated region
    $region6: #{layoutlmv3_text_embeddings.1} parent=1 // pred_check
      _
    $region7: #{layoutlmv3_text_embeddings.1} parent=1 // pred_check_branch
      %19 = sbr.rel (0) target = $region9
    $region8: #{layoutlmv3_text_embeddings.1} parent=1 // pred_region
      _
    $region9: #{layoutlmv3_text_embeddings.1} parent=1 // pred_fallthru
      _
    // Predicated region
    $region10: #{layoutlmv3_text_embeddings.1} parent=1 // pred_check
      _
    $region11: #{layoutlmv3_text_embeddings.1} parent=1 // pred_check_branch
      %21 = sbr.rel (0) target = $region13
    $region12: #{layoutlmv3_text_embeddings.1} parent=1 // pred_region
      _
    $region13: #{layoutlmv3_text_embeddings.1} parent=1 // pred_fallthru
      _
    // Predicated region
    $region14: #{layoutlmv3_text_embeddings.1} parent=1 // pred_check
      _
    $region15: #{layoutlmv3_text_embeddings.1} parent=1 // pred_check_branch
      %23 = sbr.rel (0) target = $region17
    $region16: #{layoutlmv3_text_embeddings.1} parent=1 // pred_region
      _
    $region17: #{layoutlmv3_text_embeddings.1} parent=1 // pred_fallthru
      _
    // Predicated region
    $region18: #{layoutlmv3_text_embeddings.1} parent=1 // pred_check
      _
    $region19: #{layoutlmv3_text_embeddings.1} parent=1 // pred_check_branch
      %25 = sbr.rel (0) target = $region21
    $region20: #{layoutlmv3_text_embeddings.1} parent=1 // pred_region
      _
    $region21: #{layoutlmv3_text_embeddings.1} parent=1 // pred_fallthru
      _
    // Predicated region
    $region22: #{layoutlmv3_text_embeddings.1} parent=1 // pred_check
      _
    $region23: #{layoutlmv3_text_embeddings.1} parent=1 // pred_check_branch
      %27 = sbr.rel (0) target = $region25
    $region24: #{layoutlmv3_text_embeddings.1} parent=1 // pred_region
      _
    $region25: #{layoutlmv3_text_embeddings.1} parent=1 // pred_fallthru
      _
    // Predicated region
    $region26: #{layoutlmv3_text_embeddings.1} parent=1 // pred_check
      _
    $region27: #{layoutlmv3_text_embeddings.1} parent=1 // pred_check_branch
      %29 = sbr.rel (0) target = $region29
    $region28: #{layoutlmv3_text_embeddings.1} parent=1 // pred_region
      _
    $region29: #{layoutlmv3_text_embeddings.1} parent=1 // pred_fallthru
      _
    // Predicated region
    $region30: #{layoutlmv3_text_embeddings.1} parent=1 // pred_check
      _
    $region31: #{layoutlmv3_text_embeddings.1} parent=1 // pred_check_branch
      %31 = sbr.rel (0) target = $region33
    $region32: #{layoutlmv3_text_embeddings.1} parent=1 // pred_region
      _
    $region33: #{layoutlmv3_text_embeddings.1} parent=1 // pred_fallthru
      _
    // Predicated region
    $region34: #{layoutlmv3_text_embeddings.1} parent=1 // pred_check
      _
    $region35: #{layoutlmv3_text_embeddings.1} parent=1 // pred_check_branch
      %33 = sbr.rel (0) target = $region37
    $region36: #{layoutlmv3_text_embeddings.1} parent=1 // pred_region
      _
    $region37: #{layoutlmv3_text_embeddings.1} parent=1 // pred_fallthru
      _
    // Predicated region
    $region38: #{layoutlmv3_text_embeddings.1} parent=1 // pred_check
      _
    $region39: #{layoutlmv3_text_embeddings.1} parent=1 // pred_check_branch
      %35 = sbr.rel (0) target = $region41
    $region40: #{layoutlmv3_text_embeddings.1} parent=1 // pred_region
      _
    $region41: #{layoutlmv3_text_embeddings.1} parent=1 // pred_fallthru
      _
    %v36 = vld [vmem:[%s4] sm:$0xff]
    %v37 = vld [vmem:[%s4 + $0x8] sm:$0xff]
    %v38 = vld [vmem:[%s4 + $0x10] sm:$0xff]
    %v39 = vld [vmem:[%s4 + $0x18] sm:$0xff]
    %v40 = vld [vmem:[%s4 + $0x20] sm:$0xff]
    %v41 = vld [vmem:[%s4 + $0x28] sm:$0xff]
    %v42 = vld [vmem:[%s4 + $0x30] sm:$0xff]
    %v43 = vld [vmem:[%s4 + $0x38] sm:$0xff]
    %v44 = vld [vmem:[%s4 + $0x40] sm:$0xff]
    %v45 = vld [vmem:[%s4 + $0x48] sm:$0xff]
    %v46 = vld [vmem:[%s4 + $0x50] sm:$0xff]
    %v47 = vld [vmem:[%s4 + $0x58] sm:$0xff]
    %v48 = vld [vmem:[%s4 + $0x60] sm:$0xff]
    %v49 = vld [vmem:[%s4 + $0x68] sm:$0xff]
    %v50 = vld [vmem:[%s4 + $0x70] sm:$0xff]
    %v51 = vld [vmem:[%s4 + $0x78] sm:$0xff]
    %v52 = vld [vmem:[%s4 + $0x80] sm:$0xff]
    %v53 = vld [vmem:[%s4 + $0x88] sm:$0xff]
    %v54 = vld [vmem:[%s4 + $0x90] sm:$0xff]
    %v55 = vld [vmem:[%s4 + $0x98] sm:$0xff]
    %v56 = vld [vmem:[%s4 + $0xa0] sm:$0xff]
    %v57 = vld [vmem:[%s4 + $0xa8] sm:$0xff]
    %v58 = vld [vmem:[%s4 + $0xb0] sm:$0xff]
    %v59 = vld [vmem:[%s4 + $0xb8] sm:$0xff]
    %v60 = vld [vmem:[%s4 + $0xc0] sm:$0xff]
    %v61 = vld [vmem:[%s4 + $0xc8] sm:$0xff]
    %v62 = vld [vmem:[%s4 + $0xd0] sm:$0xff]
    %v63 = vld [vmem:[%s4 + $0xd8] sm:$0xff]
    %v64 = vld [vmem:[%s4 + $0xe0] sm:$0xff]
    %v65 = vld [vmem:[%s4 + $0xe8] sm:$0xff]
    %v66 = vld [vmem:[%s4 + $0xf0] sm:$0xff]
    %v67 = vld [vmem:[%s4 + $0xf8] sm:$0xff]
    %v68 = vld [vmem:[%s4 + $0x100] sm:$0xff]
    %v69 = vld [vmem:[%s4 + $0x108] sm:$0xff]
    %v70 = vld [vmem:[%s4 + $0x110] sm:$0xff]
    %v71 = vld [vmem:[%s4 + $0x118] sm:$0xff]
    %v72 = vld [vmem:[%s4 + $0x120] sm:$0xff]
    %v73 = vld [vmem:[%s4 + $0x128] sm:$0xff]
    %v74 = vld [vmem:[%s4 + $0x130] sm:$0xff]
    %v75 = vld [vmem:[%s4 + $0x138] sm:$0xff]
    %v76 = vld [vmem:[%s4 + $0x140] sm:$0xff]
    %v77 = vld [vmem:[%s4 + $0x148] sm:$0xff]
    %v78 = vld [vmem:[%s4 + $0x150] sm:$0xff]
    %v79 = vld [vmem:[%s4 + $0x158] sm:$0xff]
    %v80 = vld [vmem:[%s4 + $0x160] sm:$0xff]
    %v81 = vld [vmem:[%s4 + $0x168] sm:$0xff]
    %v82 = vld [vmem:[%s4 + $0x170] sm:$0xff]
    %v83 = vld [vmem:[%s4 + $0x178] sm:$0xff]
    %v84 = vld [vmem:[%s4 + $0x180] sm:$0xff]
    %v85 = vld [vmem:[%s4 + $0x188] sm:$0xff]
    %v86 = vld [vmem:[%s4 + $0x190] sm:$0xff]
    %v87 = vld [vmem:[%s4 + $0x198] sm:$0xff]
    %v88 = vld [vmem:[%s4 + $0x1a0] sm:$0xff]
    %v89 = vld [vmem:[%s4 + $0x1a8] sm:$0xff]
    %v90 = vld [vmem:[%s4 + $0x1b0] sm:$0xff]
    %v91 = vld [vmem:[%s4 + $0x1b8] sm:$0xff]
    %v92 = vld [vmem:[%s4 + $0x1c0] sm:$0xff]
    %v93 = vld [vmem:[%s4 + $0x1c8] sm:$0xff]
    %v94 = vld [vmem:[%s4 + $0x1d0] sm:$0xff]
    %v95 = vld [vmem:[%s4 + $0x1d8] sm:$0xff]
    %v96 = vld [vmem:[%s4 + $0x1e0] sm:$0xff]
    %v97 = vld [vmem:[%s4 + $0x1e8] sm:$0xff]
    %v98 = vld [vmem:[%s4 + $0x1f0] sm:$0xff]
    %v99 = vld [vmem:[%s4 + $0x1f8] sm:$0xff]
    %v100 = vld [vmem:[%s4 + $0x200] sm:$0xff]
    %v101 = vld [vmem:[%s4 + $0x208] sm:$0xff]
    %v102 = vld [vmem:[%s4 + $0x210] sm:$0xff]
    %v103 = vld [vmem:[%s4 + $0x218] sm:$0xff]
    %v104 = vld [vmem:[%s4 + $0x220] sm:$0xff]
    %v105 = vld [vmem:[%s4 + $0x228] sm:$0xff]
    %v106 = vld [vmem:[%s4 + $0x230] sm:$0xff]
    %v107 = vld [vmem:[%s4 + $0x238] sm:$0xff]
    %v108 = vld [vmem:[%s4 + $0x240] sm:$0xff]
    %v109 = vld [vmem:[%s4 + $0x248] sm:$0xff]
    %v110 = vld [vmem:[%s4 + $0x250] sm:$0xff]
    %v111 = vld [vmem:[%s4 + $0x258] sm:$0xff]
    %v112 = vld [vmem:[%s4 + $0x260] sm:$0xff]
    %v113 = vld [vmem:[%s4 + $0x268] sm:$0xff]
    %v114 = vld [vmem:[%s4 + $0x270] sm:$0xff]
    %v115 = vld [vmem:[%s4 + $0x278] sm:$0xff]
    %v116 = vld [vmem:[%s4 + $0x280] sm:$0xff]
    %v117 = vld [vmem:[%s4 + $0x288] sm:$0xff]
    %v118 = vld [vmem:[%s4 + $0x290] sm:$0xff]
    %v119 = vld [vmem:[%s4 + $0x298] sm:$0xff]
    %v120 = vld [vmem:[%s4 + $0x2a0] sm:$0xff]
    %v121 = vld [vmem:[%s4 + $0x2a8] sm:$0xff]
    %v122 = vld [vmem:[%s4 + $0x2b0] sm:$0xff]
    %v123 = vld [vmem:[%s4 + $0x2b8] sm:$0xff]
    %v124 = vld [vmem:[%s4 + $0x2c0] sm:$0xff]
    %v125 = vld [vmem:[%s4 + $0x2c8] sm:$0xff]
    %v126 = vld [vmem:[%s4 + $0x2d0] sm:$0xff]
    %v127 = vld [vmem:[%s4 + $0x2d8] sm:$0xff]
    %v128 = vld [vmem:[%s4 + $0x2e0] sm:$0xff]
    %v129 = vld [vmem:[%s4 + $0x2e8] sm:$0xff]
    %v130 = vld [vmem:[%s4 + $0x2f0] sm:$0xff]
    %v131 = vld [vmem:[%s4 + $0x2f8] sm:$0xff]
    %v132 = vld [vmem:[%s4 + $0x300] sm:$0xff]
    %v133 = vld [vmem:[%s4 + $0x308] sm:$0xff]
    %v134 = vld [vmem:[%s4 + $0x310] sm:$0xff]
    %v135 = vld [vmem:[%s4 + $0x318] sm:$0xff]
    %v136 = vld [vmem:[%s4 + $0x320] sm:$0xff]
    %v137 = vld [vmem:[%s4 + $0x328] sm:$0xff]
    %v138 = vld [vmem:[%s4 + $0x330] sm:$0xff]
    %v139 = vld [vmem:[%s4 + $0x338] sm:$0xff]
    %v140 = vld [vmem:[%s4 + $0x340] sm:$0xff]
    %v141 = vld [vmem:[%s4 + $0x348] sm:$0xff]
    %v142 = vld [vmem:[%s4 + $0x350] sm:$0xff]
    %v143 = vld [vmem:[%s4 + $0x358] sm:$0xff]
    %v144 = vld [vmem:[%s4 + $0x360] sm:$0xff]
    %v145 = vld [vmem:[%s4 + $0x368] sm:$0xff]
    %v146 = vld [vmem:[%s4 + $0x370] sm:$0xff]
    %v147 = vld [vmem:[%s4 + $0x378] sm:$0xff]
    %v148 = vld [vmem:[%s4 + $0x380] sm:$0xff]
    %v149 = vld [vmem:[%s4 + $0x388] sm:$0xff]
    %v150 = vld [vmem:[%s4 + $0x390] sm:$0xff]
    %v151 = vld [vmem:[%s4 + $0x398] sm:$0xff]
    %v152 = vld [vmem:[%s4 + $0x3a0] sm:$0xff]
    %v153 = vld [vmem:[%s4 + $0x3a8] sm:$0xff]
    %v154 = vld [vmem:[%s4 + $0x3b0] sm:$0xff]
    %v155 = vld [vmem:[%s4 + $0x3b8] sm:$0xff]
    %v156 = vld [vmem:[%s4 + $0x3c0] sm:$0xff]
    %v157 = vld [vmem:[%s4 + $0x3c8] sm:$0xff]
    %v158 = vld [vmem:[%s4 + $0x3d0] sm:$0xff]
    %v159 = vld [vmem:[%s4 + $0x3d8] sm:$0xff]
    %v160 = vld [vmem:[%s4 + $0x3e0] sm:$0xff]
    %v161 = vld [vmem:[%s4 + $0x3e8] sm:$0xff]
    %v162 = vld [vmem:[%s4 + $0x3f0] sm:$0xff]
    %v163 = vld [vmem:[%s4 + $0x3f8] sm:$0xff]
    %v164 = vld [vmem:[%s0] sm:$0xff]
    %v165 = vld [vmem:[%s0 + $0x8] sm:$0xff]
    %v166 = vlaneseq
    %v167 = vand.u32 %v166, 127
    %v168 = vadd.s32 %v167, 128
    %v169 = vadd.s32 %v167, 256
    %v170 = vadd.s32 %v167, 384
    %v171 = vadd.s32 %v167, 512
    %v172 = vadd.s32 %v167, 640
    %v173 = vadd.s32 %v167, 768
    %v174 = vadd.s32 %v167, 896
    %175 = vset.pattern.permute.xlu0 2
    %176 = vperm.xlu0 %175, %v164
    %v177 = vpop.permute.xlu0 %176
    %178 = vset.pattern.permute.xlu0 2
    %179 = vperm.xlu0 %178, %v165
    %v180 = vpop.permute.xlu0 %179
    %vm181 = vcmp.eq.s32.totalorder %v177, %v167
    %vm182 = vcmp.eq.s32.totalorder %v177, %v168
    %vm183 = vcmp.eq.s32.totalorder %v177, %v169
    %vm184 = vcmp.eq.s32.totalorder %v177, %v170
    %vm185 = vcmp.eq.s32.totalorder %v177, %v171
    %vm186 = vcmp.eq.s32.totalorder %v177, %v172
    %vm187 = vcmp.eq.s32.totalorder %v177, %v173
    %vm188 = vcmp.eq.s32.totalorder %v177, %v174
    %vm189 = vcmp.eq.s32.totalorder %v180, %v167
    %vm190 = vcmp.eq.s32.totalorder %v180, %v168
    %vm191 = vcmp.eq.s32.totalorder %v180, %v169
    %vm192 = vcmp.eq.s32.totalorder %v180, %v170
    %vm193 = vcmp.eq.s32.totalorder %v180, %v171
    %vm194 = vcmp.eq.s32.totalorder %v180, %v172
    %vm195 = vcmp.eq.s32.totalorder %v180, %v173
    %vm196 = vcmp.eq.s32.totalorder %v180, %v174
    %v197 = vsel %vm181, 1, 0
    %v198 = vsel %vm182, 1, 0
    %v199 = vsel %vm183, 1, 0
    %v200 = vsel %vm184, 1, 0
    %v201 = vsel %vm185, 1, 0
    %v202 = vsel %vm186, 1, 0
    %v203 = vsel %vm187, 1, 0
    %v204 = vsel %vm188, 1, 0
    %v205 = vsel %vm189, 1, 0
    %v206 = vsel %vm190, 1, 0
    %v207 = vsel %vm191, 1, 0
    %v208 = vsel %vm192, 1, 0
    %v209 = vsel %vm193, 1, 0
    %v210 = vsel %vm194, 1, 0
    %v211 = vsel %vm195, 1, 0
    %v212 = vsel %vm196, 1, 0
    %v213 = vcvt.s32.f32 %v197
    %v214 = vcvt.s32.f32 %v198
    %v215 = vcvt.s32.f32 %v199
    %v216 = vcvt.s32.f32 %v200
    %v217 = vcvt.s32.f32 %v201
    %v218 = vcvt.s32.f32 %v202
    %v219 = vcvt.s32.f32 %v203
    %v220 = vcvt.s32.f32 %v204
    %v221 = vcvt.s32.f32 %v205
    %v222 = vcvt.s32.f32 %v206
    %v223 = vcvt.s32.f32 %v207
    %v224 = vcvt.s32.f32 %v208
    %v225 = vcvt.s32.f32 %v209
    %v226 = vcvt.s32.f32 %v210
    %v227 = vcvt.s32.f32 %v211
    %v228 = vcvt.s32.f32 %v212
    %229 = vmatpush.msra.mxu0 %v51
    %230 = vmatpush.msra.mxu0 %v50
    %231 = vmatpush.msra.mxu0 %v49
    %232 = vmatpush.msra.mxu0 %v48
    %233 = vmatpush.msra.mxu0 %v47
    %234 = vmatpush.msra.mxu0 %v46
    %235 = vmatpush.msra.mxu0 %v45
    %236 = vmatpush.msra.mxu0 %v44
    %237 = vmatpush.msra.mxu0 %v43
    %238 = vmatpush.msra.mxu0 %v42
    %239 = vmatpush.msra.mxu0 %v41
    %240 = vmatpush.msra.mxu0 %v40
    %241 = vmatpush.msra.mxu0 %v39
    %242 = vmatpush.msra.mxu0 %v38
    %243 = vmatpush.msra.mxu0 %v37
    %244 = vmatpush.msra.mxu0 %v36
    %245 = vmatmul.f32.gmra.mxu0 %v213
    %v246 = vpop.f32.mrf.mxu0
    %v247 = vadd.f32 0.0, %v246
    %248 = vmatmul.f32.gmra.mxu0 %v221
    %v249 = vpop.f32.mrf.mxu0
    %v250 = vadd.f32 0.0, %v249
    %251 = vdwg.mxu0
    %252 = vmatpush.msra.mxu0 %v67
    %253 = vmatpush.msra.mxu0 %v66
    %254 = vmatpush.msra.mxu0 %v65
    %255 = vmatpush.msra.mxu0 %v64
    %256 = vmatpush.msra.mxu0 %v63
    %257 = vmatpush.msra.mxu0 %v62
    %258 = vmatpush.msra.mxu0 %v61
    %259 = vmatpush.msra.mxu0 %v60
    %260 = vmatpush.msra.mxu0 %v59
    %261 = vmatpush.msra.mxu0 %v58
    %262 = vmatpush.msra.mxu0 %v57
    %263 = vmatpush.msra.mxu0 %v56
    %264 = vmatpush.msra.mxu0 %v55
    %265 = vmatpush.msra.mxu0 %v54
    %266 = vmatpush.msra.mxu0 %v53
    %267 = vmatpush.msra.mxu0 %v52
    %268 = vmatmul.f32.gmra.mxu0 %v214
    %v269 = vpop.f32.mrf.mxu0
    %v270 = vadd.f32 %v247, %v269
    %271 = vmatmul.f32.gmra.mxu0 %v222
    %v272 = vpop.f32.mrf.mxu0
    %v273 = vadd.f32 %v250, %v272
    %274 = vdwg.mxu0
    %275 = vmatpush.msra.mxu0 %v83
    %276 = vmatpush.msra.mxu0 %v82
    %277 = vmatpush.msra.mxu0 %v81
    %278 = vmatpush.msra.mxu0 %v80
    %279 = vmatpush.msra.mxu0 %v79
    %280 = vmatpush.msra.mxu0 %v78
    %281 = vmatpush.msra.mxu0 %v77
    %282 = vmatpush.msra.mxu0 %v76
    %283 = vmatpush.msra.mxu0 %v75
    %284 = vmatpush.msra.mxu0 %v74
    %285 = vmatpush.msra.mxu0 %v73
    %286 = vmatpush.msra.mxu0 %v72
    %287 = vmatpush.msra.mxu0 %v71
    %288 = vmatpush.msra.mxu0 %v70
    %289 = vmatpush.msra.mxu0 %v69
    %290 = vmatpush.msra.mxu0 %v68
    %291 = vmatmul.f32.gmra.mxu0 %v215
    %v292 = vpop.f32.mrf.mxu0
    %v293 = vadd.f32 %v270, %v292
    %294 = vmatmul.f32.gmra.mxu0 %v223
    %v295 = vpop.f32.mrf.mxu0
    %v296 = vadd.f32 %v273, %v295
    %297 = vdwg.mxu0
    %298 = vmatpush.msra.mxu0 %v99
    %299 = vmatpush.msra.mxu0 %v98
    %300 = vmatpush.msra.mxu0 %v97
    %301 = vmatpush.msra.mxu0 %v96
    %302 = vmatpush.msra.mxu0 %v95
    %303 = vmatpush.msra.mxu0 %v94
    %304 = vmatpush.msra.mxu0 %v93
    %305 = vmatpush.msra.mxu0 %v92
    %306 = vmatpush.msra.mxu0 %v91
    %307 = vmatpush.msra.mxu0 %v90
    %308 = vmatpush.msra.mxu0 %v89
    %309 = vmatpush.msra.mxu0 %v88
    %310 = vmatpush.msra.mxu0 %v87
    %311 = vmatpush.msra.mxu0 %v86
    %312 = vmatpush.msra.mxu0 %v85
    %313 = vmatpush.msra.mxu0 %v84
    %314 = vmatmul.f32.gmra.mxu0 %v216
    %v315 = vpop.f32.mrf.mxu0
    %v316 = vadd.f32 %v293, %v315
    %317 = vmatmul.f32.gmra.mxu0 %v224
    %v318 = vpop.f32.mrf.mxu0
    %v319 = vadd.f32 %v296, %v318
    %320 = vdwg.mxu0
    %321 = vmatpush.msra.mxu0 %v115
    %322 = vmatpush.msra.mxu0 %v114
    %323 = vmatpush.msra.mxu0 %v113
    %324 = vmatpush.msra.mxu0 %v112
    %325 = vmatpush.msra.mxu0 %v111
    %326 = vmatpush.msra.mxu0 %v110
    %327 = vmatpush.msra.mxu0 %v109
    %328 = vmatpush.msra.mxu0 %v108
    %329 = vmatpush.msra.mxu0 %v107
    %330 = vmatpush.msra.mxu0 %v106
    %331 = vmatpush.msra.mxu0 %v105
    %332 = vmatpush.msra.mxu0 %v104
    %333 = vmatpush.msra.mxu0 %v103
    %334 = vmatpush.msra.mxu0 %v102
    %335 = vmatpush.msra.mxu0 %v101
    %336 = vmatpush.msra.mxu0 %v100
    %337 = vmatmul.f32.gmra.mxu0 %v217
    %v338 = vpop.f32.mrf.mxu0
    %v339 = vadd.f32 %v316, %v338
    %340 = vmatmul.f32.gmra.mxu0 %v225
    %v341 = vpop.f32.mrf.mxu0
    %v342 = vadd.f32 %v319, %v341
    %343 = vdwg.mxu0
    %344 = vmatpush.msra.mxu0 %v131
    %345 = vmatpush.msra.mxu0 %v130
    %346 = vmatpush.msra.mxu0 %v129
    %347 = vmatpush.msra.mxu0 %v128
    %348 = vmatpush.msra.mxu0 %v127
    %349 = vmatpush.msra.mxu0 %v126
    %350 = vmatpush.msra.mxu0 %v125
    %351 = vmatpush.msra.mxu0 %v124
    %352 = vmatpush.msra.mxu0 %v123
    %353 = vmatpush.msra.mxu0 %v122
    %354 = vmatpush.msra.mxu0 %v121
    %355 = vmatpush.msra.mxu0 %v120
    %356 = vmatpush.msra.mxu0 %v119
    %357 = vmatpush.msra.mxu0 %v118
    %358 = vmatpush.msra.mxu0 %v117
    %359 = vmatpush.msra.mxu0 %v116
    %360 = vmatmul.f32.gmra.mxu0 %v218
    %v361 = vpop.f32.mrf.mxu0
    %v362 = vadd.f32 %v339, %v361
    %363 = vmatmul.f32.gmra.mxu0 %v226
    %v364 = vpop.f32.mrf.mxu0
    %v365 = vadd.f32 %v342, %v364
    %366 = vdwg.mxu0
    %367 = vmatpush.msra.mxu0 %v147
    %368 = vmatpush.msra.mxu0 %v146
    %369 = vmatpush.msra.mxu0 %v145
    %370 = vmatpush.msra.mxu0 %v144
    %371 = vmatpush.msra.mxu0 %v143
    %372 = vmatpush.msra.mxu0 %v142
    %373 = vmatpush.msra.mxu0 %v141
    %374 = vmatpush.msra.mxu0 %v140
    %375 = vmatpush.msra.mxu0 %v139
    %376 = vmatpush.msra.mxu0 %v138
    %377 = vmatpush.msra.mxu0 %v137
    %378 = vmatpush.msra.mxu0 %v136
    %379 = vmatpush.msra.mxu0 %v135
    %380 = vmatpush.msra.mxu0 %v134
    %381 = vmatpush.msra.mxu0 %v133
    %382 = vmatpush.msra.mxu0 %v132
    %383 = vmatmul.f32.gmra.mxu0 %v219
    %v384 = vpop.f32.mrf.mxu0
    %v385 = vadd.f32 %v362, %v384
    %386 = vmatmul.f32.gmra.mxu0 %v227
    %v387 = vpop.f32.mrf.mxu0
    %v388 = vadd.f32 %v365, %v387
    %389 = vdwg.mxu0
    %390 = vmatpush.msra.mxu0 %v163
    %391 = vmatpush.msra.mxu0 %v162
    %392 = vmatpush.msra.mxu0 %v161
    %393 = vmatpush.msra.mxu0 %v160
    %394 = vmatpush.msra.mxu0 %v159
    %395 = vmatpush.msra.mxu0 %v158
    %396 = vmatpush.msra.mxu0 %v157
    %397 = vmatpush.msra.mxu0 %v156
    %398 = vmatpush.msra.mxu0 %v155
    %399 = vmatpush.msra.mxu0 %v154
    %400 = vmatpush.msra.mxu0 %v153
    %401 = vmatpush.msra.mxu0 %v152
    %402 = vmatpush.msra.mxu0 %v151
    %403 = vmatpush.msra.mxu0 %v150
    %404 = vmatpush.msra.mxu0 %v149
    %405 = vmatpush.msra.mxu0 %v148
    %406 = vmatmul.f32.gmra.mxu0 %v220
    %v407 = vpop.f32.mrf.mxu0
    %v408 = vadd.f32 %v385, %v407
    %409 = vmatmul.f32.gmra.mxu0 %v228
    %v410 = vpop.f32.mrf.mxu0
    %v411 = vadd.f32 %v388, %v410
    %412 = vdwg.mxu0
    %vm413 = vcmask 64512
    %414 = vst.msk [vmem:[#allocation2] sm:$0xff] %vm413, %v408
    %415 = vst.msk [vmem:[#allocation2 + $0x8] sm:$0xff] %vm413, %v411
    %v416 = vld [vmem:[%s5] sm:$0xff]
    %v417 = vld [vmem:[%s5 + $0x8] sm:$0xff]
    %v418 = vld [vmem:[%s5 + $0x10] sm:$0xff]
    %v419 = vld [vmem:[%s5 + $0x18] sm:$0xff]
    %v420 = vld [vmem:[%s5 + $0x20] sm:$0xff]
    %v421 = vld [vmem:[%s5 + $0x28] sm:$0xff]
    %v422 = vld [vmem:[%s5 + $0x30] sm:$0xff]
    %v423 = vld [vmem:[%s5 + $0x38] sm:$0xff]
    %v424 = vld [vmem:[%s5 + $0x40] sm:$0xff]
    %v425 = vld [vmem:[%s5 + $0x48] sm:$0xff]
    %v426 = vld [vmem:[%s5 + $0x50] sm:$0xff]
    %v427 = vld [vmem:[%s5 + $0x58] sm:$0xff]
    %v428 = vld [vmem:[%s5 + $0x60] sm:$0xff]
    %v429 = vld [vmem:[%s5 + $0x68] sm:$0xff]
    %v430 = vld [vmem:[%s5 + $0x70] sm:$0xff]
    %v431 = vld [vmem:[%s5 + $0x78] sm:$0xff]
    %v432 = vld [vmem:[%s5 + $0x80] sm:$0xff]
    %v433 = vld [vmem:[%s5 + $0x88] sm:$0xff]
    %v434 = vld [vmem:[%s5 + $0x90] sm:$0xff]
    %v435 = vld [vmem:[%s5 + $0x98] sm:$0xff]
    %v436 = vld [vmem:[%s5 + $0xa0] sm:$0xff]
    %v437 = vld [vmem:[%s5 + $0xa8] sm:$0xff]
    %v438 = vld [vmem:[%s5 + $0xb0] sm:$0xff]
    %v439 = vld [vmem:[%s5 + $0xb8] sm:$0xff]
    %v440 = vld [vmem:[%s5 + $0xc0] sm:$0xff]
    %v441 = vld [vmem:[%s5 + $0xc8] sm:$0xff]
    %v442 = vld [vmem:[%s5 + $0xd0] sm:$0xff]
    %v443 = vld [vmem:[%s5 + $0xd8] sm:$0xff]
    %v444 = vld [vmem:[%s5 + $0xe0] sm:$0xff]
    %v445 = vld [vmem:[%s5 + $0xe8] sm:$0xff]
    %v446 = vld [vmem:[%s5 + $0xf0] sm:$0xff]
    %v447 = vld [vmem:[%s5 + $0xf8] sm:$0xff]
    %v448 = vld [vmem:[%s5 + $0x100] sm:$0xff]
    %v449 = vld [vmem:[%s5 + $0x108] sm:$0xff]
    %v450 = vld [vmem:[%s5 + $0x110] sm:$0xff]
    %v451 = vld [vmem:[%s5 + $0x118] sm:$0xff]
    %v452 = vld [vmem:[%s5 + $0x120] sm:$0xff]
    %v453 = vld [vmem:[%s5 + $0x128] sm:$0xff]
    %v454 = vld [vmem:[%s5 + $0x130] sm:$0xff]
    %v455 = vld [vmem:[%s5 + $0x138] sm:$0xff]
    %v456 = vld [vmem:[%s5 + $0x140] sm:$0xff]
    %v457 = vld [vmem:[%s5 + $0x148] sm:$0xff]
    %v458 = vld [vmem:[%s5 + $0x150] sm:$0xff]
    %v459 = vld [vmem:[%s5 + $0x158] sm:$0xff]
    %v460 = vld [vmem:[%s5 + $0x160] sm:$0xff]
    %v461 = vld [vmem:[%s5 + $0x168] sm:$0xff]
    %v462 = vld [vmem:[%s5 + $0x170] sm:$0xff]
    %v463 = vld [vmem:[%s5 + $0x178] sm:$0xff]
    %v464 = vld [vmem:[%s5 + $0x180] sm:$0xff]
    %v465 = vld [vmem:[%s5 + $0x188] sm:$0xff]
    %v466 = vld [vmem:[%s5 + $0x190] sm:$0xff]
    %v467 = vld [vmem:[%s5 + $0x198] sm:$0xff]
    %v468 = vld [vmem:[%s5 + $0x1a0] sm:$0xff]
    %v469 = vld [vmem:[%s5 + $0x1a8] sm:$0xff]
    %v470 = vld [vmem:[%s5 + $0x1b0] sm:$0xff]
    %v471 = vld [vmem:[%s5 + $0x1b8] sm:$0xff]
    %v472 = vld [vmem:[%s5 + $0x1c0] sm:$0xff]
    %v473 = vld [vmem:[%s5 + $0x1c8] sm:$0xff]
    %v474 = vld [vmem:[%s5 + $0x1d0] sm:$0xff]
    %v475 = vld [vmem:[%s5 + $0x1d8] sm:$0xff]
    %v476 = vld [vmem:[%s5 + $0x1e0] sm:$0xff]
    %v477 = vld [vmem:[%s5 + $0x1e8] sm:$0xff]
    %v478 = vld [vmem:[%s5 + $0x1f0] sm:$0xff]
    %v479 = vld [vmem:[%s5 + $0x1f8] sm:$0xff]
    %v480 = vld [vmem:[%s5 + $0x200] sm:$0xff]
    %v481 = vld [vmem:[%s5 + $0x208] sm:$0xff]
    %v482 = vld [vmem:[%s5 + $0x210] sm:$0xff]
    %v483 = vld [vmem:[%s5 + $0x218] sm:$0xff]
    %v484 = vld [vmem:[%s5 + $0x220] sm:$0xff]
    %v485 = vld [vmem:[%s5 + $0x228] sm:$0xff]
    %v486 = vld [vmem:[%s5 + $0x230] sm:$0xff]
    %v487 = vld [vmem:[%s5 + $0x238] sm:$0xff]
    %v488 = vld [vmem:[%s5 + $0x240] sm:$0xff]
    %v489 = vld [vmem:[%s5 + $0x248] sm:$0xff]
    %v490 = vld [vmem:[%s5 + $0x250] sm:$0xff]
    %v491 = vld [vmem:[%s5 + $0x258] sm:$0xff]
    %v492 = vld [vmem:[%s5 + $0x260] sm:$0xff]
    %v493 = vld [vmem:[%s5 + $0x268] sm:$0xff]
    %v494 = vld [vmem:[%s5 + $0x270] sm:$0xff]
    %v495 = vld [vmem:[%s5 + $0x278] sm:$0xff]
    %v496 = vld [vmem:[%s5 + $0x280] sm:$0xff]
    %v497 = vld [vmem:[%s5 + $0x288] sm:$0xff]
    %v498 = vld [vmem:[%s5 + $0x290] sm:$0xff]
    %v499 = vld [vmem:[%s5 + $0x298] sm:$0xff]
    %v500 = vld [vmem:[%s5 + $0x2a0] sm:$0xff]
    %v501 = vld [vmem:[%s5 + $0x2a8] sm:$0xff]
    %v502 = vld [vmem:[%s5 + $0x2b0] sm:$0xff]
    %v503 = vld [vmem:[%s5 + $0x2b8] sm:$0xff]
    %v504 = vld [vmem:[%s5 + $0x2c0] sm:$0xff]
    %v505 = vld [vmem:[%s5 + $0x2c8] sm:$0xff]
    %v506 = vld [vmem:[%s5 + $0x2d0] sm:$0xff]
    %v507 = vld [vmem:[%s5 + $0x2d8] sm:$0xff]
    %v508 = vld [vmem:[%s5 + $0x2e0] sm:$0xff]
    %v509 = vld [vmem:[%s5 + $0x2e8] sm:$0xff]
    %v510 = vld [vmem:[%s5 + $0x2f0] sm:$0xff]
    %v511 = vld [vmem:[%s5 + $0x2f8] sm:$0xff]
    %v512 = vld [vmem:[%s5 + $0x300] sm:$0xff]
    %v513 = vld [vmem:[%s5 + $0x308] sm:$0xff]
    %v514 = vld [vmem:[%s5 + $0x310] sm:$0xff]
    %v515 = vld [vmem:[%s5 + $0x318] sm:$0xff]
    %v516 = vld [vmem:[%s5 + $0x320] sm:$0xff]
    %v517 = vld [vmem:[%s5 + $0x328] sm:$0xff]
    %v518 = vld [vmem:[%s5 + $0x330] sm:$0xff]
    %v519 = vld [vmem:[%s5 + $0x338] sm:$0xff]
    %v520 = vld [vmem:[%s5 + $0x340] sm:$0xff]
    %v521 = vld [vmem:[%s5 + $0x348] sm:$0xff]
    %v522 = vld [vmem:[%s5 + $0x350] sm:$0xff]
    %v523 = vld [vmem:[%s5 + $0x358] sm:$0xff]
    %v524 = vld [vmem:[%s5 + $0x360] sm:$0xff]
    %v525 = vld [vmem:[%s5 + $0x368] sm:$0xff]
    %v526 = vld [vmem:[%s5 + $0x370] sm:$0xff]
    %v527 = vld [vmem:[%s5 + $0x378] sm:$0xff]
    %v528 = vld [vmem:[%s5 + $0x380] sm:$0xff]
    %v529 = vld [vmem:[%s5 + $0x388] sm:$0xff]
    %v530 = vld [vmem:[%s5 + $0x390] sm:$0xff]
    %v531 = vld [vmem:[%s5 + $0x398] sm:$0xff]
    %v532 = vld [vmem:[%s5 + $0x3a0] sm:$0xff]
    %v533 = vld [vmem:[%s5 + $0x3a8] sm:$0xff]
    %v534 = vld [vmem:[%s5 + $0x3b0] sm:$0xff]
    %v535 = vld [vmem:[%s5 + $0x3b8] sm:$0xff]
    %v536 = vld [vmem:[%s5 + $0x3c0] sm:$0xff]
    %v537 = vld [vmem:[%s5 + $0x3c8] sm:$0xff]
    %v538 = vld [vmem:[%s5 + $0x3d0] sm:$0xff]
    %v539 = vld [vmem:[%s5 + $0x3d8] sm:$0xff]
    %v540 = vld [vmem:[%s5 + $0x3e0] sm:$0xff]
    %v541 = vld [vmem:[%s5 + $0x3e8] sm:$0xff]
    %v542 = vld [vmem:[%s5 + $0x3f0] sm:$0xff]
    %v543 = vld [vmem:[%s5 + $0x3f8] sm:$0xff]
    %v544 = vld [vmem:[%s0] sm:$0xff]
    %v545 = vld [vmem:[%s0 + $0x8] sm:$0xff]
    %546 = vset.pattern.permute.xlu0 3
    %547 = vperm.xlu0 %546, %v544
    %v548 = vpop.permute.xlu0 %547
    %549 = vset.pattern.permute.xlu0 3
    %550 = vperm.xlu0 %549, %v545
    %v551 = vpop.permute.xlu0 %550
    %vm552 = vcmp.eq.s32.totalorder %v548, %v167
    %vm553 = vcmp.eq.s32.totalorder %v548, %v168
    %vm554 = vcmp.eq.s32.totalorder %v548, %v169
    %vm555 = vcmp.eq.s32.totalorder %v548, %v170
    %vm556 = vcmp.eq.s32.totalorder %v548, %v171
    %vm557 = vcmp.eq.s32.totalorder %v548, %v172
    %vm558 = vcmp.eq.s32.totalorder %v548, %v173
    %vm559 = vcmp.eq.s32.totalorder %v548, %v174
    %vm560 = vcmp.eq.s32.totalorder %v551, %v167
    %vm561 = vcmp.eq.s32.totalorder %v551, %v168
    %vm562 = vcmp.eq.s32.totalorder %v551, %v169
    %vm563 = vcmp.eq.s32.totalorder %v551, %v170
    %vm564 = vcmp.eq.s32.totalorder %v551, %v171
    %vm565 = vcmp.eq.s32.totalorder %v551, %v172
    %vm566 = vcmp.eq.s32.totalorder %v551, %v173
    %vm567 = vcmp.eq.s32.totalorder %v551, %v174
    %v568 = vsel %vm552, 1, 0
    %v569 = vsel %vm553, 1, 0
    %v570 = vsel %vm554, 1, 0
    %v571 = vsel %vm555, 1, 0
    %v572 = vsel %vm556, 1, 0
    %v573 = vsel %vm557, 1, 0
    %v574 = vsel %vm558, 1, 0
    %v575 = vsel %vm559, 1, 0
    %v576 = vsel %vm560, 1, 0
    %v577 = vsel %vm561, 1, 0
    %v578 = vsel %vm562, 1, 0
    %v579 = vsel %vm563, 1, 0
    %v580 = vsel %vm564, 1, 0
    %v581 = vsel %vm565, 1, 0
    %v582 = vsel %vm566, 1, 0
    %v583 = vsel %vm567, 1, 0
    %v584 = vcvt.s32.f32 %v568
    %v585 = vcvt.s32.f32 %v569
    %v586 = vcvt.s32.f32 %v570
    %v587 = vcvt.s32.f32 %v571
    %v588 = vcvt.s32.f32 %v572
    %v589 = vcvt.s32.f32 %v573
    %v590 = vcvt.s32.f32 %v574
    %v591 = vcvt.s32.f32 %v575
    %v592 = vcvt.s32.f32 %v576
    %v593 = vcvt.s32.f32 %v577
    %v594 = vcvt.s32.f32 %v578
    %v595 = vcvt.s32.f32 %v579
    %v596 = vcvt.s32.f32 %v580
    %v597 = vcvt.s32.f32 %v581
    %v598 = vcvt.s32.f32 %v582
    %v599 = vcvt.s32.f32 %v583
    %600 = vmatpush.msra.mxu0 %v431
    %601 = vmatpush.msra.mxu0 %v430
    %602 = vmatpush.msra.mxu0 %v429
    %603 = vmatpush.msra.mxu0 %v428
    %604 = vmatpush.msra.mxu0 %v427
    %605 = vmatpush.msra.mxu0 %v426
    %606 = vmatpush.msra.mxu0 %v425
    %607 = vmatpush.msra.mxu0 %v424
    %608 = vmatpush.msra.mxu0 %v423
    %609 = vmatpush.msra.mxu0 %v422
    %610 = vmatpush.msra.mxu0 %v421
    %611 = vmatpush.msra.mxu0 %v420
    %612 = vmatpush.msra.mxu0 %v419
    %613 = vmatpush.msra.mxu0 %v418
    %614 = vmatpush.msra.mxu0 %v417
    %615 = vmatpush.msra.mxu0 %v416
    %616 = vmatmul.f32.gmra.mxu0 %v584
    %v617 = vpop.f32.mrf.mxu0
    %v618 = vadd.f32 0.0, %v617
    %619 = vmatmul.f32.gmra.mxu0 %v592
    %v620 = vpop.f32.mrf.mxu0
    %v621 = vadd.f32 0.0, %v620
    %622 = vdwg.mxu0
    %623 = vmatpush.msra.mxu0 %v447
    %624 = vmatpush.msra.mxu0 %v446
    %625 = vmatpush.msra.mxu0 %v445
    %626 = vmatpush.msra.mxu0 %v444
    %627 = vmatpush.msra.mxu0 %v443
    %628 = vmatpush.msra.mxu0 %v442
    %629 = vmatpush.msra.mxu0 %v441
    %630 = vmatpush.msra.mxu0 %v440
    %631 = vmatpush.msra.mxu0 %v439
    %632 = vmatpush.msra.mxu0 %v438
    %633 = vmatpush.msra.mxu0 %v437
    %634 = vmatpush.msra.mxu0 %v436
    %635 = vmatpush.msra.mxu0 %v435
    %636 = vmatpush.msra.mxu0 %v434
    %637 = vmatpush.msra.mxu0 %v433
    %638 = vmatpush.msra.mxu0 %v432
    %639 = vmatmul.f32.gmra.mxu0 %v585
    %v640 = vpop.f32.mrf.mxu0
    %v641 = vadd.f32 %v618, %v640
    %642 = vmatmul.f32.gmra.mxu0 %v593
    %v643 = vpop.f32.mrf.mxu0
    %v644 = vadd.f32 %v621, %v643
    %645 = vdwg.mxu0
    %646 = vmatpush.msra.mxu0 %v463
    %647 = vmatpush.msra.mxu0 %v462
    %648 = vmatpush.msra.mxu0 %v461
    %649 = vmatpush.msra.mxu0 %v460
    %650 = vmatpush.msra.mxu0 %v459
    %651 = vmatpush.msra.mxu0 %v458
    %652 = vmatpush.msra.mxu0 %v457
    %653 = vmatpush.msra.mxu0 %v456
    %654 = vmatpush.msra.mxu0 %v455
    %655 = vmatpush.msra.mxu0 %v454
    %656 = vmatpush.msra.mxu0 %v453
    %657 = vmatpush.msra.mxu0 %v452
    %658 = vmatpush.msra.mxu0 %v451
    %659 = vmatpush.msra.mxu0 %v450
    %660 = vmatpush.msra.mxu0 %v449
    %661 = vmatpush.msra.mxu0 %v448
    %662 = vmatmul.f32.gmra.mxu0 %v586
    %v663 = vpop.f32.mrf.mxu0
    %v664 = vadd.f32 %v641, %v663
    %665 = vmatmul.f32.gmra.mxu0 %v594
    %v666 = vpop.f32.mrf.mxu0
    %v667 = vadd.f32 %v644, %v666
    %668 = vdwg.mxu0
    %669 = vmatpush.msra.mxu0 %v479
    %670 = vmatpush.msra.mxu0 %v478
    %671 = vmatpush.msra.mxu0 %v477
    %672 = vmatpush.msra.mxu0 %v476
    %673 = vmatpush.msra.mxu0 %v475
    %674 = vmatpush.msra.mxu0 %v474
    %675 = vmatpush.msra.mxu0 %v473
    %676 = vmatpush.msra.mxu0 %v472
    %677 = vmatpush.msra.mxu0 %v471
    %678 = vmatpush.msra.mxu0 %v470
    %679 = vmatpush.msra.mxu0 %v469
    %680 = vmatpush.msra.mxu0 %v468
    %681 = vmatpush.msra.mxu0 %v467
    %682 = vmatpush.msra.mxu0 %v466
    %683 = vmatpush.msra.mxu0 %v465
    %684 = vmatpush.msra.mxu0 %v464
    %685 = vmatmul.f32.gmra.mxu0 %v587
    %v686 = vpop.f32.mrf.mxu0
    %v687 = vadd.f32 %v664, %v686
    %688 = vmatmul.f32.gmra.mxu0 %v595
    %v689 = vpop.f32.mrf.mxu0
    %v690 = vadd.f32 %v667, %v689
    %691 = vdwg.mxu0
    %692 = vmatpush.msra.mxu0 %v495
    %693 = vmatpush.msra.mxu0 %v494
    %694 = vmatpush.msra.mxu0 %v493
    %695 = vmatpush.msra.mxu0 %v492
    %696 = vmatpush.msra.mxu0 %v491
    %697 = vmatpush.msra.mxu0 %v490
    %698 = vmatpush.msra.mxu0 %v489
    %699 = vmatpush.msra.mxu0 %v488
    %700 = vmatpush.msra.mxu0 %v487
    %701 = vmatpush.msra.mxu0 %v486
    %702 = vmatpush.msra.mxu0 %v485
    %703 = vmatpush.msra.mxu0 %v484
    %704 = vmatpush.msra.mxu0 %v483
    %705 = vmatpush.msra.mxu0 %v482
    %706 = vmatpush.msra.mxu0 %v481
    %707 = vmatpush.msra.mxu0 %v480
    %708 = vmatmul.f32.gmra.mxu0 %v588
    %v709 = vpop.f32.mrf.mxu0
    %v710 = vadd.f32 %v687, %v709
    %711 = vmatmul.f32.gmra.mxu0 %v596
    %v712 = vpop.f32.mrf.mxu0
    %v713 = vadd.f32 %v690, %v712
    %714 = vdwg.mxu0
    %715 = vmatpush.msra.mxu0 %v511
    %716 = vmatpush.msra.mxu0 %v510
    %717 = vmatpush.msra.mxu0 %v509
    %718 = vmatpush.msra.mxu0 %v508
    %719 = vmatpush.msra.mxu0 %v507
    %720 = vmatpush.msra.mxu0 %v506
    %721 = vmatpush.msra.mxu0 %v505
    %722 = vmatpush.msra.mxu0 %v504
    %723 = vmatpush.msra.mxu0 %v503
    %724 = vmatpush.msra.mxu0 %v502
    %725 = vmatpush.msra.mxu0 %v501
    %726 = vmatpush.msra.mxu0 %v500
    %727 = vmatpush.msra.mxu0 %v499
    %728 = vmatpush.msra.mxu0 %v498
    %729 = vmatpush.msra.mxu0 %v497
    %730 = vmatpush.msra.mxu0 %v496
    %731 = vmatmul.f32.gmra.mxu0 %v589
    %v732 = vpop.f32.mrf.mxu0
    %v733 = vadd.f32 %v710, %v732
    %734 = vmatmul.f32.gmra.mxu0 %v597
    %v735 = vpop.f32.mrf.mxu0
    %v736 = vadd.f32 %v713, %v735
    %737 = vdwg.mxu0
    %738 = vmatpush.msra.mxu0 %v527
    %739 = vmatpush.msra.mxu0 %v526
    %740 = vmatpush.msra.mxu0 %v525
    %741 = vmatpush.msra.mxu0 %v524
    %742 = vmatpush.msra.mxu0 %v523
    %743 = vmatpush.msra.mxu0 %v522
    %744 = vmatpush.msra.mxu0 %v521
    %745 = vmatpush.msra.mxu0 %v520
    %746 = vmatpush.msra.mxu0 %v519
    %747 = vmatpush.msra.mxu0 %v518
    %748 = vmatpush.msra.mxu0 %v517
    %749 = vmatpush.msra.mxu0 %v516
    %750 = vmatpush.msra.mxu0 %v515
    %751 = vmatpush.msra.mxu0 %v514
    %752 = vmatpush.msra.mxu0 %v513
    %753 = vmatpush.msra.mxu0 %v512
    %754 = vmatmul.f32.gmra.mxu0 %v590
    %v755 = vpop.f32.mrf.mxu0
    %v756 = vadd.f32 %v733, %v755
    %757 = vmatmul.f32.gmra.mxu0 %v598
    %v758 = vpop.f32.mrf.mxu0
    %v759 = vadd.f32 %v736, %v758
    %760 = vdwg.mxu0
    %761 = vmatpush.msra.mxu0 %v543
    %762 = vmatpush.msra.mxu0 %v542
    %763 = vmatpush.msra.mxu0 %v541
    %764 = vmatpush.msra.mxu0 %v540
    %765 = vmatpush.msra.mxu0 %v539
    %766 = vmatpush.msra.mxu0 %v538
    %767 = vmatpush.msra.mxu0 %v537
    %768 = vmatpush.msra.mxu0 %v536
    %769 = vmatpush.msra.mxu0 %v535
    %770 = vmatpush.msra.mxu0 %v534
    %771 = vmatpush.msra.mxu0 %v533
    %772 = vmatpush.msra.mxu0 %v532
    %773 = vmatpush.msra.mxu0 %v531
    %774 = vmatpush.msra.mxu0 %v530
    %775 = vmatpush.msra.mxu0 %v529
    %776 = vmatpush.msra.mxu0 %v528
    %777 = vmatmul.f32.gmra.mxu0 %v591
    %v778 = vpop.f32.mrf.mxu0
    %v779 = vadd.f32 %v756, %v778
    %780 = vmatmul.f32.gmra.mxu0 %v599
    %v781 = vpop.f32.mrf.mxu0
    %v782 = vadd.f32 %v759, %v781
    %783 = vdwg.mxu0
    %786 = vrot.lane.b32.xlu0 %v779, 8
    %v787 = vpop.permute.xlu0 %786
    %788 = vrot.lane.b32.xlu0 %v782, 8
    %v789 = vpop.permute.xlu0 %788
    %vm792 = vcmask 130112
    %793 = vst.msk [vmem:[#allocation2] sm:$0xff] %vm792, %v787
    %794 = vst.msk [vmem:[#allocation2 + $0x8] sm:$0xff] %vm792, %v789
    %v795 = vld [vmem:[%s4] sm:$0xff]
    %v796 = vld [vmem:[%s4 + $0x8] sm:$0xff]
    %v797 = vld [vmem:[%s4 + $0x10] sm:$0xff]
    %v798 = vld [vmem:[%s4 + $0x18] sm:$0xff]
    %v799 = vld [vmem:[%s4 + $0x20] sm:$0xff]
    %v800 = vld [vmem:[%s4 + $0x28] sm:$0xff]
    %v801 = vld [vmem:[%s4 + $0x30] sm:$0xff]
    %v802 = vld [vmem:[%s4 + $0x38] sm:$0xff]
    %v803 = vld [vmem:[%s4 + $0x40] sm:$0xff]
    %v804 = vld [vmem:[%s4 + $0x48] sm:$0xff]
    %v805 = vld [vmem:[%s4 + $0x50] sm:$0xff]
    %v806 = vld [vmem:[%s4 + $0x58] sm:$0xff]
    %v807 = vld [vmem:[%s4 + $0x60] sm:$0xff]
    %v808 = vld [vmem:[%s4 + $0x68] sm:$0xff]
    %v809 = vld [vmem:[%s4 + $0x70] sm:$0xff]
    %v810 = vld [vmem:[%s4 + $0x78] sm:$0xff]
    %v811 = vld [vmem:[%s4 + $0x80] sm:$0xff]
    %v812 = vld [vmem:[%s4 + $0x88] sm:$0xff]
    %v813 = vld [vmem:[%s4 + $0x90] sm:$0xff]
    %v814 = vld [vmem:[%s4 + $0x98] sm:$0xff]
    %v815 = vld [vmem:[%s4 + $0xa0] sm:$0xff]
    %v816 = vld [vmem:[%s4 + $0xa8] sm:$0xff]
    %v817 = vld [vmem:[%s4 + $0xb0] sm:$0xff]
    %v818 = vld [vmem:[%s4 + $0xb8] sm:$0xff]
    %v819 = vld [vmem:[%s4 + $0xc0] sm:$0xff]
    %v820 = vld [vmem:[%s4 + $0xc8] sm:$0xff]
    %v821 = vld [vmem:[%s4 + $0xd0] sm:$0xff]
    %v822 = vld [vmem:[%s4 + $0xd8] sm:$0xff]
    %v823 = vld [vmem:[%s4 + $0xe0] sm:$0xff]
    %v824 = vld [vmem:[%s4 + $0xe8] sm:$0xff]
    %v825 = vld [vmem:[%s4 + $0xf0] sm:$0xff]
    %v826 = vld [vmem:[%s4 + $0xf8] sm:$0xff]
    %v827 = vld [vmem:[%s4 + $0x100] sm:$0xff]
    %v828 = vld [vmem:[%s4 + $0x108] sm:$0xff]
    %v829 = vld [vmem:[%s4 + $0x110] sm:$0xff]
    %v830 = vld [vmem:[%s4 + $0x118] sm:$0xff]
    %v831 = vld [vmem:[%s4 + $0x120] sm:$0xff]
    %v832 = vld [vmem:[%s4 + $0x128] sm:$0xff]
    %v833 = vld [vmem:[%s4 + $0x130] sm:$0xff]
    %v834 = vld [vmem:[%s4 + $0x138] sm:$0xff]
    %v835 = vld [vmem:[%s4 + $0x140] sm:$0xff]
    %v836 = vld [vmem:[%s4 + $0x148] sm:$0xff]
    %v837 = vld [vmem:[%s4 + $0x150] sm:$0xff]
    %v838 = vld [vmem:[%s4 + $0x158] sm:$0xff]
    %v839 = vld [vmem:[%s4 + $0x160] sm:$0xff]
    %v840 = vld [vmem:[%s4 + $0x168] sm:$0xff]
    %v841 = vld [vmem:[%s4 + $0x170] sm:$0xff]
    %v842 = vld [vmem:[%s4 + $0x178] sm:$0xff]
    %v843 = vld [vmem:[%s4 + $0x180] sm:$0xff]
    %v844 = vld [vmem:[%s4 + $0x188] sm:$0xff]
    %v845 = vld [vmem:[%s4 + $0x190] sm:$0xff]
    %v846 = vld [vmem:[%s4 + $0x198] sm:$0xff]
    %v847 = vld [vmem:[%s4 + $0x1a0] sm:$0xff]
    %v848 = vld [vmem:[%s4 + $0x1a8] sm:$0xff]
    %v849 = vld [vmem:[%s4 + $0x1b0] sm:$0xff]
    %v850 = vld [vmem:[%s4 + $0x1b8] sm:$0xff]
    %v851 = vld [vmem:[%s4 + $0x1c0] sm:$0xff]
    %v852 = vld [vmem:[%s4 + $0x1c8] sm:$0xff]
    %v853 = vld [vmem:[%s4 + $0x1d0] sm:$0xff]
    %v854 = vld [vmem:[%s4 + $0x1d8] sm:$0xff]
    %v855 = vld [vmem:[%s4 + $0x1e0] sm:$0xff]
    %v856 = vld [vmem:[%s4 + $0x1e8] sm:$0xff]
    %v857 = vld [vmem:[%s4 + $0x1f0] sm:$0xff]
    %v858 = vld [vmem:[%s4 + $0x1f8] sm:$0xff]
    %v859 = vld [vmem:[%s4 + $0x200] sm:$0xff]
    %v860 = vld [vmem:[%s4 + $0x208] sm:$0xff]
    %v861 = vld [vmem:[%s4 + $0x210] sm:$0xff]
    %v862 = vld [vmem:[%s4 + $0x218] sm:$0xff]
    %v863 = vld [vmem:[%s4 + $0x220] sm:$0xff]
    %v864 = vld [vmem:[%s4 + $0x228] sm:$0xff]
    %v865 = vld [vmem:[%s4 + $0x230] sm:$0xff]
    %v866 = vld [vmem:[%s4 + $0x238] sm:$0xff]
    %v867 = vld [vmem:[%s4 + $0x240] sm:$0xff]
    %v868 = vld [vmem:[%s4 + $0x248] sm:$0xff]
    %v869 = vld [vmem:[%s4 + $0x250] sm:$0xff]
    %v870 = vld [vmem:[%s4 + $0x258] sm:$0xff]
    %v871 = vld [vmem:[%s4 + $0x260] sm:$0xff]
    %v872 = vld [vmem:[%s4 + $0x268] sm:$0xff]
    %v873 = vld [vmem:[%s4 + $0x270] sm:$0xff]
    %v874 = vld [vmem:[%s4 + $0x278] sm:$0xff]
    %v875 = vld [vmem:[%s4 + $0x280] sm:$0xff]
    %v876 = vld [vmem:[%s4 + $0x288] sm:$0xff]
    %v877 = vld [vmem:[%s4 + $0x290] sm:$0xff]
    %v878 = vld [vmem:[%s4 + $0x298] sm:$0xff]
    %v879 = vld [vmem:[%s4 + $0x2a0] sm:$0xff]
    %v880 = vld [vmem:[%s4 + $0x2a8] sm:$0xff]
    %v881 = vld [vmem:[%s4 + $0x2b0] sm:$0xff]
    %v882 = vld [vmem:[%s4 + $0x2b8] sm:$0xff]
    %v883 = vld [vmem:[%s4 + $0x2c0] sm:$0xff]
    %v884 = vld [vmem:[%s4 + $0x2c8] sm:$0xff]
    %v885 = vld [vmem:[%s4 + $0x2d0] sm:$0xff]
    %v886 = vld [vmem:[%s4 + $0x2d8] sm:$0xff]
    %v887 = vld [vmem:[%s4 + $0x2e0] sm:$0xff]
    %v888 = vld [vmem:[%s4 + $0x2e8] sm:$0xff]
    %v889 = vld [vmem:[%s4 + $0x2f0] sm:$0xff]
    %v890 = vld [vmem:[%s4 + $0x2f8] sm:$0xff]
    %v891 = vld [vmem:[%s4 + $0x300] sm:$0xff]
    %v892 = vld [vmem:[%s4 + $0x308] sm:$0xff]
    %v893 = vld [vmem:[%s4 + $0x310] sm:$0xff]
    %v894 = vld [vmem:[%s4 + $0x318] sm:$0xff]
    %v895 = vld [vmem:[%s4 + $0x320] sm:$0xff]
    %v896 = vld [vmem:[%s4 + $0x328] sm:$0xff]
    %v897 = vld [vmem:[%s4 + $0x330] sm:$0xff]
    %v898 = vld [vmem:[%s4 + $0x338] sm:$0xff]
    %v899 = vld [vmem:[%s4 + $0x340] sm:$0xff]
    %v900 = vld [vmem:[%s4 + $0x348] sm:$0xff]
    %v901 = vld [vmem:[%s4 + $0x350] sm:$0xff]
    %v902 = vld [vmem:[%s4 + $0x358] sm:$0xff]
    %v903 = vld [vmem:[%s4 + $0x360] sm:$0xff]
    %v904 = vld [vmem:[%s4 + $0x368] sm:$0xff]
    %v905 = vld [vmem:[%s4 + $0x370] sm:$0xff]
    %v906 = vld [vmem:[%s4 + $0x378] sm:$0xff]
    %v907 = vld [vmem:[%s4 + $0x380] sm:$0xff]
    %v908 = vld [vmem:[%s4 + $0x388] sm:$0xff]
    %v909 = vld [vmem:[%s4 + $0x390] sm:$0xff]
    %v910 = vld [vmem:[%s4 + $0x398] sm:$0xff]
    %v911 = vld [vmem:[%s4 + $0x3a0] sm:$0xff]
    %v912 = vld [vmem:[%s4 + $0x3a8] sm:$0xff]
    %v913 = vld [vmem:[%s4 + $0x3b0] sm:$0xff]
    %v914 = vld [vmem:[%s4 + $0x3b8] sm:$0xff]
    %v915 = vld [vmem:[%s4 + $0x3c0] sm:$0xff]
    %v916 = vld [vmem:[%s4 + $0x3c8] sm:$0xff]
    %v917 = vld [vmem:[%s4 + $0x3d0] sm:$0xff]
    %v918 = vld [vmem:[%s4 + $0x3d8] sm:$0xff]
    %v919 = vld [vmem:[%s4 + $0x3e0] sm:$0xff]
    %v920 = vld [vmem:[%s4 + $0x3e8] sm:$0xff]
    %v921 = vld [vmem:[%s4 + $0x3f0] sm:$0xff]
    %v922 = vld [vmem:[%s4 + $0x3f8] sm:$0xff]
    %v923 = vld [vmem:[%s0] sm:$0xff]
    %v924 = vld [vmem:[%s0 + $0x8] sm:$0xff]
    %925 = vset.pattern.permute.xlu0 4
    %926 = vperm.xlu0 %925, %v923
    %v927 = vpop.permute.xlu0 %926
    %928 = vset.pattern.permute.xlu0 4
    %929 = vperm.xlu0 %928, %v924
    %v930 = vpop.permute.xlu0 %929
    %vm931 = vcmp.eq.s32.totalorder %v927, %v167
    %vm932 = vcmp.eq.s32.totalorder %v927, %v168
    %vm933 = vcmp.eq.s32.totalorder %v927, %v169
    %vm934 = vcmp.eq.s32.totalorder %v927, %v170
    %vm935 = vcmp.eq.s32.totalorder %v927, %v171
    %vm936 = vcmp.eq.s32.totalorder %v927, %v172
    %vm937 = vcmp.eq.s32.totalorder %v927, %v173
    %vm938 = vcmp.eq.s32.totalorder %v927, %v174
    %vm939 = vcmp.eq.s32.totalorder %v930, %v167
    %vm940 = vcmp.eq.s32.totalorder %v930, %v168
    %vm941 = vcmp.eq.s32.totalorder %v930, %v169
    %vm942 = vcmp.eq.s32.totalorder %v930, %v170
    %vm943 = vcmp.eq.s32.totalorder %v930, %v171
    %vm944 = vcmp.eq.s32.totalorder %v930, %v172
    %vm945 = vcmp.eq.s32.totalorder %v930, %v173
    %vm946 = vcmp.eq.s32.totalorder %v930, %v174
    %v947 = vsel %vm931, 1, 0
    %v948 = vsel %vm932, 1, 0
    %v949 = vsel %vm933, 1, 0
    %v950 = vsel %vm934, 1, 0
    %v951 = vsel %vm935, 1, 0
    %v952 = vsel %vm936, 1, 0
    %v953 = vsel %vm937, 1, 0
    %v954 = vsel %vm938, 1, 0
    %v955 = vsel %vm939, 1, 0
    %v956 = vsel %vm940, 1, 0
    %v957 = vsel %vm941, 1, 0
    %v958 = vsel %vm942, 1, 0
    %v959 = vsel %vm943, 1, 0
    %v960 = vsel %vm944, 1, 0
    %v961 = vsel %vm945, 1, 0
    %v962 = vsel %vm946, 1, 0
    %v963 = vcvt.s32.f32 %v947
    %v964 = vcvt.s32.f32 %v948
    %v965 = vcvt.s32.f32 %v949
    %v966 = vcvt.s32.f32 %v950
    %v967 = vcvt.s32.f32 %v951
    %v968 = vcvt.s32.f32 %v952
    %v969 = vcvt.s32.f32 %v953
    %v970 = vcvt.s32.f32 %v954
    %v971 = vcvt.s32.f32 %v955
    %v972 = vcvt.s32.f32 %v956
    %v973 = vcvt.s32.f32 %v957
    %v974 = vcvt.s32.f32 %v958
    %v975 = vcvt.s32.f32 %v959
    %v976 = vcvt.s32.f32 %v960
    %v977 = vcvt.s32.f32 %v961
    %v978 = vcvt.s32.f32 %v962
    %979 = vmatpush.msra.mxu0 %v810
    %980 = vmatpush.msra.mxu0 %v809
    %981 = vmatpush.msra.mxu0 %v808
    %982 = vmatpush.msra.mxu0 %v807
    %983 = vmatpush.msra.mxu0 %v806
    %984 = vmatpush.msra.mxu0 %v805
    %985 = vmatpush.msra.mxu0 %v804
    %986 = vmatpush.msra.mxu0 %v803
    %987 = vmatpush.msra.mxu0 %v802
    %988 = vmatpush.msra.mxu0 %v801
    %989 = vmatpush.msra.mxu0 %v800
    %990 = vmatpush.msra.mxu0 %v799
    %991 = vmatpush.msra.mxu0 %v798
    %992 = vmatpush.msra.mxu0 %v797
    %993 = vmatpush.msra.mxu0 %v796
    %994 = vmatpush.msra.mxu0 %v795
    %995 = vmatmul.f32.gmra.mxu0 %v963
    %v996 = vpop.f32.mrf.mxu0
    %v997 = vadd.f32 0.0, %v996
    %998 = vmatmul.f32.gmra.mxu0 %v971
    %v999 = vpop.f32.mrf.mxu0
    %v1000 = vadd.f32 0.0, %v999
    %1001 = vdwg.mxu0
    %1002 = vmatpush.msra.mxu0 %v826
    %1003 = vmatpush.msra.mxu0 %v825
    %1004 = vmatpush.msra.mxu0 %v824
    %1005 = vmatpush.msra.mxu0 %v823
    %1006 = vmatpush.msra.mxu0 %v822
    %1007 = vmatpush.msra.mxu0 %v821
    %1008 = vmatpush.msra.mxu0 %v820
    %1009 = vmatpush.msra.mxu0 %v819
    %1010 = vmatpush.msra.mxu0 %v818
    %1011 = vmatpush.msra.mxu0 %v817
    %1012 = vmatpush.msra.mxu0 %v816
    %1013 = vmatpush.msra.mxu0 %v815
    %1014 = vmatpush.msra.mxu0 %v814
    %1015 = vmatpush.msra.mxu0 %v813
    %1016 = vmatpush.msra.mxu0 %v812
    %1017 = vmatpush.msra.mxu0 %v811
    %1018 = vmatmul.f32.gmra.mxu0 %v964
    %v1019 = vpop.f32.mrf.mxu0
    %v1020 = vadd.f32 %v997, %v1019
    %1021 = vmatmul.f32.gmra.mxu0 %v972
    %v1022 = vpop.f32.mrf.mxu0
    %v1023 = vadd.f32 %v1000, %v1022
    %1024 = vdwg.mxu0
    %1025 = vmatpush.msra.mxu0 %v842
    %1026 = vmatpush.msra.mxu0 %v841
    %1027 = vmatpush.msra.mxu0 %v840
    %1028 = vmatpush.msra.mxu0 %v839
    %1029 = vmatpush.msra.mxu0 %v838
    %1030 = vmatpush.msra.mxu0 %v837
    %1031 = vmatpush.msra.mxu0 %v836
    %1032 = vmatpush.msra.mxu0 %v835
    %1033 = vmatpush.msra.mxu0 %v834
    %1034 = vmatpush.msra.mxu0 %v833
    %1035 = vmatpush.msra.mxu0 %v832
    %1036 = vmatpush.msra.mxu0 %v831
    %1037 = vmatpush.msra.mxu0 %v830
    %1038 = vmatpush.msra.mxu0 %v829
    %1039 = vmatpush.msra.mxu0 %v828
    %1040 = vmatpush.msra.mxu0 %v827
    %1041 = vmatmul.f32.gmra.mxu0 %v965
    %v1042 = vpop.f32.mrf.mxu0
    %v1043 = vadd.f32 %v1020, %v1042
    %1044 = vmatmul.f32.gmra.mxu0 %v973
    %v1045 = vpop.f32.mrf.mxu0
    %v1046 = vadd.f32 %v1023, %v1045
    %1047 = vdwg.mxu0
    %1048 = vmatpush.msra.mxu0 %v858
    %1049 = vmatpush.msra.mxu0 %v857
    %1050 = vmatpush.msra.mxu0 %v856
    %1051 = vmatpush.msra.mxu0 %v855
    %1052 = vmatpush.msra.mxu0 %v854
    %1053 = vmatpush.msra.mxu0 %v853
    %1054 = vmatpush.msra.mxu0 %v852
    %1055 = vmatpush.msra.mxu0 %v851
    %1056 = vmatpush.msra.mxu0 %v850
    %1057 = vmatpush.msra.mxu0 %v849
    %1058 = vmatpush.msra.mxu0 %v848
    %1059 = vmatpush.msra.mxu0 %v847
    %1060 = vmatpush.msra.mxu0 %v846
    %1061 = vmatpush.msra.mxu0 %v845
    %1062 = vmatpush.msra.mxu0 %v844
    %1063 = vmatpush.msra.mxu0 %v843
    %1064 = vmatmul.f32.gmra.mxu0 %v966
    %v1065 = vpop.f32.mrf.mxu0
    %v1066 = vadd.f32 %v1043, %v1065
    %1067 = vmatmul.f32.gmra.mxu0 %v974
    %v1068 = vpop.f32.mrf.mxu0
    %v1069 = vadd.f32 %v1046, %v1068
    %1070 = vdwg.mxu0
    %1071 = vmatpush.msra.mxu0 %v874
    %1072 = vmatpush.msra.mxu0 %v873
    %1073 = vmatpush.msra.mxu0 %v872
    %1074 = vmatpush.msra.mxu0 %v871
    %1075 = vmatpush.msra.mxu0 %v870
    %1076 = vmatpush.msra.mxu0 %v869
    %1077 = vmatpush.msra.mxu0 %v868
    %1078 = vmatpush.msra.mxu0 %v867
    %1079 = vmatpush.msra.mxu0 %v866
    %1080 = vmatpush.msra.mxu0 %v865
    %1081 = vmatpush.msra.mxu0 %v864
    %1082 = vmatpush.msra.mxu0 %v863
    %1083 = vmatpush.msra.mxu0 %v862
    %1084 = vmatpush.msra.mxu0 %v861
    %1085 = vmatpush.msra.mxu0 %v860
    %1086 = vmatpush.msra.mxu0 %v859
    %1087 = vmatmul.f32.gmra.mxu0 %v967
    %v1088 = vpop.f32.mrf.mxu0
    %v1089 = vadd.f32 %v1066, %v1088
    %1090 = vmatmul.f32.gmra.mxu0 %v975
    %v1091 = vpop.f32.mrf.mxu0
    %v1092 = vadd.f32 %v1069, %v1091
    %1093 = vdwg.mxu0
    %1094 = vmatpush.msra.mxu0 %v890
    %1095 = vmatpush.msra.mxu0 %v889
    %1096 = vmatpush.msra.mxu0 %v888
    %1097 = vmatpush.msra.mxu0 %v887
    %1098 = vmatpush.msra.mxu0 %v886
    %1099 = vmatpush.msra.mxu0 %v885
    %1100 = vmatpush.msra.mxu0 %v884
    %1101 = vmatpush.msra.mxu0 %v883
    %1102 = vmatpush.msra.mxu0 %v882
    %1103 = vmatpush.msra.mxu0 %v881
    %1104 = vmatpush.msra.mxu0 %v880
    %1105 = vmatpush.msra.mxu0 %v879
    %1106 = vmatpush.msra.mxu0 %v878
    %1107 = vmatpush.msra.mxu0 %v877
    %1108 = vmatpush.msra.mxu0 %v876
    %1109 = vmatpush.msra.mxu0 %v875
    %1110 = vmatmul.f32.gmra.mxu0 %v968
    %v1111 = vpop.f32.mrf.mxu0
    %v1112 = vadd.f32 %v1089, %v1111
    %1113 = vmatmul.f32.gmra.mxu0 %v976
    %v1114 = vpop.f32.mrf.mxu0
    %v1115 = vadd.f32 %v1092, %v1114
    %1116 = vdwg.mxu0
    %1117 = vmatpush.msra.mxu0 %v906
    %1118 = vmatpush.msra.mxu0 %v905
    %1119 = vmatpush.msra.mxu0 %v904
    %1120 = vmatpush.msra.mxu0 %v903
    %1121 = vmatpush.msra.mxu0 %v902
    %1122 = vmatpush.msra.mxu0 %v901
    %1123 = vmatpush.msra.mxu0 %v900
    %1124 = vmatpush.msra.mxu0 %v899
    %1125 = vmatpush.msra.mxu0 %v898
    %1126 = vmatpush.msra.mxu0 %v897
    %1127 = vmatpush.msra.mxu0 %v896
    %1128 = vmatpush.msra.mxu0 %v895
    %1129 = vmatpush.msra.mxu0 %v894
    %1130 = vmatpush.msra.mxu0 %v893
    %1131 = vmatpush.msra.mxu0 %v892
    %1132 = vmatpush.msra.mxu0 %v891
    %1133 = vmatmul.f32.gmra.mxu0 %v969
    %v1134 = vpop.f32.mrf.mxu0
    %v1135 = vadd.f32 %v1112, %v1134
    %1136 = vmatmul.f32.gmra.mxu0 %v977
    %v1137 = vpop.f32.mrf.mxu0
    %v1138 = vadd.f32 %v1115, %v1137
    %1139 = vdwg.mxu0
    %1140 = vmatpush.msra.mxu0 %v922
    %1141 = vmatpush.msra.mxu0 %v921
    %1142 = vmatpush.msra.mxu0 %v920
    %1143 = vmatpush.msra.mxu0 %v919
    %1144 = vmatpush.msra.mxu0 %v918
    %1145 = vmatpush.msra.mxu0 %v917
    %1146 = vmatpush.msra.mxu0 %v916
    %1147 = vmatpush.msra.mxu0 %v915
    %1148 = vmatpush.msra.mxu0 %v914
    %1149 = vmatpush.msra.mxu0 %v913
    %1150 = vmatpush.msra.mxu0 %v912
    %1151 = vmatpush.msra.mxu0 %v911
    %1152 = vmatpush.msra.mxu0 %v910
    %1153 = vmatpush.msra.mxu0 %v909
    %1154 = vmatpush.msra.mxu0 %v908
    %1155 = vmatpush.msra.mxu0 %v907
    %1156 = vmatmul.f32.gmra.mxu0 %v970
    %v1157 = vpop.f32.mrf.mxu0
    %v1158 = vadd.f32 %v1135, %v1157
    %1159 = vmatmul.f32.gmra.mxu0 %v978
    %v1160 = vpop.f32.mrf.mxu0
    %v1161 = vadd.f32 %v1138, %v1160
    %1162 = vdwg.mxu0
    %1165 = vrot.lane.b32.xlu0 %v1158, 16
    %v1166 = vpop.permute.xlu0 %1165
    %1167 = vrot.lane.b32.xlu0 %v1161, 16
    %v1168 = vpop.permute.xlu0 %1167
    %vm1171 = vcmask 195712
    %1172 = vst.msk [vmem:[#allocation2] sm:$0xff] %vm1171, %v1166
    %1173 = vst.msk [vmem:[#allocation2 + $0x8] sm:$0xff] %vm1171, %v1168
    %v1174 = vld [vmem:[%s5] sm:$0xff]
    %v1175 = vld [vmem:[%s5 + $0x8] sm:$0xff]
    %v1176 = vld [vmem:[%s5 + $0x10] sm:$0xff]
    %v1177 = vld [vmem:[%s5 + $0x18] sm:$0xff]
    %v1178 = vld [vmem:[%s5 + $0x20] sm:$0xff]
    %v1179 = vld [vmem:[%s5 + $0x28] sm:$0xff]
    %v1180 = vld [vmem:[%s5 + $0x30] sm:$0xff]
    %v1181 = vld [vmem:[%s5 + $0x38] sm:$0xff]
    %v1182 = vld [vmem:[%s5 + $0x40] sm:$0xff]
    %v1183 = vld [vmem:[%s5 + $0x48] sm:$0xff]
    %v1184 = vld [vmem:[%s5 + $0x50] sm:$0xff]
    %v1185 = vld [vmem:[%s5 + $0x58] sm:$0xff]
    %v1186 = vld [vmem:[%s5 + $0x60] sm:$0xff]
    %v1187 = vld [vmem:[%s5 + $0x68] sm:$0xff]
    %v1188 = vld [vmem:[%s5 + $0x70] sm:$0xff]
    %v1189 = vld [vmem:[%s5 + $0x78] sm:$0xff]
    %v1190 = vld [vmem:[%s5 + $0x80] sm:$0xff]
    %v1191 = vld [vmem:[%s5 + $0x88] sm:$0xff]
    %v1192 = vld [vmem:[%s5 + $0x90] sm:$0xff]
    %v1193 = vld [vmem:[%s5 + $0x98] sm:$0xff]
    %v1194 = vld [vmem:[%s5 + $0xa0] sm:$0xff]
    %v1195 = vld [vmem:[%s5 + $0xa8] sm:$0xff]
    %v1196 = vld [vmem:[%s5 + $0xb0] sm:$0xff]
    %v1197 = vld [vmem:[%s5 + $0xb8] sm:$0xff]
    %v1198 = vld [vmem:[%s5 + $0xc0] sm:$0xff]
    %v1199 = vld [vmem:[%s5 + $0xc8] sm:$0xff]
    %v1200 = vld [vmem:[%s5 + $0xd0] sm:$0xff]
    %v1201 = vld [vmem:[%s5 + $0xd8] sm:$0xff]
    %v1202 = vld [vmem:[%s5 + $0xe0] sm:$0xff]
    %v1203 = vld [vmem:[%s5 + $0xe8] sm:$0xff]
    %v1204 = vld [vmem:[%s5 + $0xf0] sm:$0xff]
    %v1205 = vld [vmem:[%s5 + $0xf8] sm:$0xff]
    %v1206 = vld [vmem:[%s5 + $0x100] sm:$0xff]
    %v1207 = vld [vmem:[%s5 + $0x108] sm:$0xff]
    %v1208 = vld [vmem:[%s5 + $0x110] sm:$0xff]
    %v1209 = vld [vmem:[%s5 + $0x118] sm:$0xff]
    %v1210 = vld [vmem:[%s5 + $0x120] sm:$0xff]
    %v1211 = vld [vmem:[%s5 + $0x128] sm:$0xff]
    %v1212 = vld [vmem:[%s5 + $0x130] sm:$0xff]
    %v1213 = vld [vmem:[%s5 + $0x138] sm:$0xff]
    %v1214 = vld [vmem:[%s5 + $0x140] sm:$0xff]
    %v1215 = vld [vmem:[%s5 + $0x148] sm:$0xff]
    %v1216 = vld [vmem:[%s5 + $0x150] sm:$0xff]
    %v1217 = vld [vmem:[%s5 + $0x158] sm:$0xff]
    %v1218 = vld [vmem:[%s5 + $0x160] sm:$0xff]
    %v1219 = vld [vmem:[%s5 + $0x168] sm:$0xff]
    %v1220 = vld [vmem:[%s5 + $0x170] sm:$0xff]
    %v1221 = vld [vmem:[%s5 + $0x178] sm:$0xff]
    %v1222 = vld [vmem:[%s5 + $0x180] sm:$0xff]
    %v1223 = vld [vmem:[%s5 + $0x188] sm:$0xff]
    %v1224 = vld [vmem:[%s5 + $0x190] sm:$0xff]
    %v1225 = vld [vmem:[%s5 + $0x198] sm:$0xff]
    %v1226 = vld [vmem:[%s5 + $0x1a0] sm:$0xff]
    %v1227 = vld [vmem:[%s5 + $0x1a8] sm:$0xff]
    %v1228 = vld [vmem:[%s5 + $0x1b0] sm:$0xff]
    %v1229 = vld [vmem:[%s5 + $0x1b8] sm:$0xff]
    %v1230 = vld [vmem:[%s5 + $0x1c0] sm:$0xff]
    %v1231 = vld [vmem:[%s5 + $0x1c8] sm:$0xff]
    %v1232 = vld [vmem:[%s5 + $0x1d0] sm:$0xff]
    %v1233 = vld [vmem:[%s5 + $0x1d8] sm:$0xff]
    %v1234 = vld [vmem:[%s5 + $0x1e0] sm:$0xff]
    %v1235 = vld [vmem:[%s5 + $0x1e8] sm:$0xff]
    %v1236 = vld [vmem:[%s5 + $0x1f0] sm:$0xff]
    %v1237 = vld [vmem:[%s5 + $0x1f8] sm:$0xff]
    %v1238 = vld [vmem:[%s5 + $0x200] sm:$0xff]
    %v1239 = vld [vmem:[%s5 + $0x208] sm:$0xff]
    %v1240 = vld [vmem:[%s5 + $0x210] sm:$0xff]
    %v1241 = vld [vmem:[%s5 + $0x218] sm:$0xff]
    %v1242 = vld [vmem:[%s5 + $0x220] sm:$0xff]
    %v1243 = vld [vmem:[%s5 + $0x228] sm:$0xff]
    %v1244 = vld [vmem:[%s5 + $0x230] sm:$0xff]
    %v1245 = vld [vmem:[%s5 + $0x238] sm:$0xff]
    %v1246 = vld [vmem:[%s5 + $0x240] sm:$0xff]
    %v1247 = vld [vmem:[%s5 + $0x248] sm:$0xff]
    %v1248 = vld [vmem:[%s5 + $0x250] sm:$0xff]
    %v1249 = vld [vmem:[%s5 + $0x258] sm:$0xff]
    %v1250 = vld [vmem:[%s5 + $0x260] sm:$0xff]
    %v1251 = vld [vmem:[%s5 + $0x268] sm:$0xff]
    %v1252 = vld [vmem:[%s5 + $0x270] sm:$0xff]
    %v1253 = vld [vmem:[%s5 + $0x278] sm:$0xff]
    %v1254 = vld [vmem:[%s5 + $0x280] sm:$0xff]
    %v1255 = vld [vmem:[%s5 + $0x288] sm:$0xff]
    %v1256 = vld [vmem:[%s5 + $0x290] sm:$0xff]
    %v1257 = vld [vmem:[%s5 + $0x298] sm:$0xff]
    %v1258 = vld [vmem:[%s5 + $0x2a0] sm:$0xff]
    %v1259 = vld [vmem:[%s5 + $0x2a8] sm:$0xff]
    %v1260 = vld [vmem:[%s5 + $0x2b0] sm:$0xff]
    %v1261 = vld [vmem:[%s5 + $0x2b8] sm:$0xff]
    %v1262 = vld [vmem:[%s5 + $0x2c0] sm:$0xff]
    %v1263 = vld [vmem:[%s5 + $0x2c8] sm:$0xff]
    %v1264 = vld [vmem:[%s5 + $0x2d0] sm:$0xff]
    %v1265 = vld [vmem:[%s5 + $0x2d8] sm:$0xff]
    %v1266 = vld [vmem:[%s5 + $0x2e0] sm:$0xff]
    %v1267 = vld [vmem:[%s5 + $0x2e8] sm:$0xff]
    %v1268 = vld [vmem:[%s5 + $0x2f0] sm:$0xff]
    %v1269 = vld [vmem:[%s5 + $0x2f8] sm:$0xff]
    %v1270 = vld [vmem:[%s5 + $0x300] sm:$0xff]
    %v1271 = vld [vmem:[%s5 + $0x308] sm:$0xff]
    %v1272 = vld [vmem:[%s5 + $0x310] sm:$0xff]
    %v1273 = vld [vmem:[%s5 + $0x318] sm:$0xff]
    %v1274 = vld [vmem:[%s5 + $0x320] sm:$0xff]
    %v1275 = vld [vmem:[%s5 + $0x328] sm:$0xff]
    %v1276 = vld [vmem:[%s5 + $0x330] sm:$0xff]
    %v1277 = vld [vmem:[%s5 + $0x338] sm:$0xff]
    %v1278 = vld [vmem:[%s5 + $0x340] sm:$0xff]
    %v1279 = vld [vmem:[%s5 + $0x348] sm:$0xff]
    %v1280 = vld [vmem:[%s5 + $0x350] sm:$0xff]
    %v1281 = vld [vmem:[%s5 + $0x358] sm:$0xff]
    %v1282 = vld [vmem:[%s5 + $0x360] sm:$0xff]
    %v1283 = vld [vmem:[%s5 + $0x368] sm:$0xff]
    %v1284 = vld [vmem:[%s5 + $0x370] sm:$0xff]
    %v1285 = vld [vmem:[%s5 + $0x378] sm:$0xff]
    %v1286 = vld [vmem:[%s5 + $0x380] sm:$0xff]
    %v1287 = vld [vmem:[%s5 + $0x388] sm:$0xff]
    %v1288 = vld [vmem:[%s5 + $0x390] sm:$0xff]
    %v1289 = vld [vmem:[%s5 + $0x398] sm:$0xff]
    %v1290 = vld [vmem:[%s5 + $0x3a0] sm:$0xff]
    %v1291 = vld [vmem:[%s5 + $0x3a8] sm:$0xff]
    %v1292 = vld [vmem:[%s5 + $0x3b0] sm:$0xff]
    %v1293 = vld [vmem:[%s5 + $0x3b8] sm:$0xff]
    %v1294 = vld [vmem:[%s5 + $0x3c0] sm:$0xff]
    %v1295 = vld [vmem:[%s5 + $0x3c8] sm:$0xff]
    %v1296 = vld [vmem:[%s5 + $0x3d0] sm:$0xff]
    %v1297 = vld [vmem:[%s5 + $0x3d8] sm:$0xff]
    %v1298 = vld [vmem:[%s5 + $0x3e0] sm:$0xff]
    %v1299 = vld [vmem:[%s5 + $0x3e8] sm:$0xff]
    %v1300 = vld [vmem:[%s5 + $0x3f0] sm:$0xff]
    %v1301 = vld [vmem:[%s5 + $0x3f8] sm:$0xff]
    %v1302 = vld [vmem:[%s0] sm:$0xff]
    %v1303 = vld [vmem:[%s0 + $0x8] sm:$0xff]
    %1304 = vset.pattern.permute.xlu0 5
    %1305 = vperm.xlu0 %1304, %v1302
    %v1306 = vpop.permute.xlu0 %1305
    %1307 = vset.pattern.permute.xlu0 5
    %1308 = vperm.xlu0 %1307, %v1303
    %v1309 = vpop.permute.xlu0 %1308
    %vm1310 = vcmp.eq.s32.totalorder %v1306, %v167
    %vm1311 = vcmp.eq.s32.totalorder %v1306, %v168
    %vm1312 = vcmp.eq.s32.totalorder %v1306, %v169
    %vm1313 = vcmp.eq.s32.totalorder %v1306, %v170
    %vm1314 = vcmp.eq.s32.totalorder %v1306, %v171
    %vm1315 = vcmp.eq.s32.totalorder %v1306, %v172
    %vm1316 = vcmp.eq.s32.totalorder %v1306, %v173
    %vm1317 = vcmp.eq.s32.totalorder %v1306, %v174
    %vm1318 = vcmp.eq.s32.totalorder %v1309, %v167
    %vm1319 = vcmp.eq.s32.totalorder %v1309, %v168
    %vm1320 = vcmp.eq.s32.totalorder %v1309, %v169
    %vm1321 = vcmp.eq.s32.totalorder %v1309, %v170
    %vm1322 = vcmp.eq.s32.totalorder %v1309, %v171
    %vm1323 = vcmp.eq.s32.totalorder %v1309, %v172
    %vm1324 = vcmp.eq.s32.totalorder %v1309, %v173
    %vm1325 = vcmp.eq.s32.totalorder %v1309, %v174
    %v1326 = vsel %vm1310, 1, 0
    %v1327 = vsel %vm1311, 1, 0
    %v1328 = vsel %vm1312, 1, 0
    %v1329 = vsel %vm1313, 1, 0
    %v1330 = vsel %vm1314, 1, 0
    %v1331 = vsel %vm1315, 1, 0
    %v1332 = vsel %vm1316, 1, 0
    %v1333 = vsel %vm1317, 1, 0
    %v1334 = vsel %vm1318, 1, 0
    %v1335 = vsel %vm1319, 1, 0
    %v1336 = vsel %vm1320, 1, 0
    %v1337 = vsel %vm1321, 1, 0
    %v1338 = vsel %vm1322, 1, 0
    %v1339 = vsel %vm1323, 1, 0
    %v1340 = vsel %vm1324, 1, 0
    %v1341 = vsel %vm1325, 1, 0
    %v1342 = vcvt.s32.f32 %v1326
    %v1343 = vcvt.s32.f32 %v1327
    %v1344 = vcvt.s32.f32 %v1328
    %v1345 = vcvt.s32.f32 %v1329
    %v1346 = vcvt.s32.f32 %v1330
    %v1347 = vcvt.s32.f32 %v1331
    %v1348 = vcvt.s32.f32 %v1332
    %v1349 = vcvt.s32.f32 %v1333
    %v1350 = vcvt.s32.f32 %v1334
    %v1351 = vcvt.s32.f32 %v1335
    %v1352 = vcvt.s32.f32 %v1336
    %v1353 = vcvt.s32.f32 %v1337
    %v1354 = vcvt.s32.f32 %v1338
    %v1355 = vcvt.s32.f32 %v1339
    %v1356 = vcvt.s32.f32 %v1340
    %v1357 = vcvt.s32.f32 %v1341
    %1358 = vmatpush.msra.mxu0 %v1189
    %1359 = vmatpush.msra.mxu0 %v1188
    %1360 = vmatpush.msra.mxu0 %v1187
    %1361 = vmatpush.msra.mxu0 %v1186
    %1362 = vmatpush.msra.mxu0 %v1185
    %1363 = vmatpush.msra.mxu0 %v1184
    %1364 = vmatpush.msra.mxu0 %v1183
    %1365 = vmatpush.msra.mxu0 %v1182
    %1366 = vmatpush.msra.mxu0 %v1181
    %1367 = vmatpush.msra.mxu0 %v1180
    %1368 = vmatpush.msra.mxu0 %v1179
    %1369 = vmatpush.msra.mxu0 %v1178
    %1370 = vmatpush.msra.mxu0 %v1177
    %1371 = vmatpush.msra.mxu0 %v1176
    %1372 = vmatpush.msra.mxu0 %v1175
    %1373 = vmatpush.msra.mxu0 %v1174
    %1374 = vmatmul.f32.gmra.mxu0 %v1342
    %v1375 = vpop.f32.mrf.mxu0
    %v1376 = vadd.f32 0.0, %v1375
    %1377 = vmatmul.f32.gmra.mxu0 %v1350
    %v1378 = vpop.f32.mrf.mxu0
    %v1379 = vadd.f32 0.0, %v1378
    %1380 = vdwg.mxu0
    %1381 = vmatpush.msra.mxu0 %v1205
    %1382 = vmatpush.msra.mxu0 %v1204
    %1383 = vmatpush.msra.mxu0 %v1203
    %1384 = vmatpush.msra.mxu0 %v1202
    %1385 = vmatpush.msra.mxu0 %v1201
    %1386 = vmatpush.msra.mxu0 %v1200
    %1387 = vmatpush.msra.mxu0 %v1199
    %1388 = vmatpush.msra.mxu0 %v1198
    %1389 = vmatpush.msra.mxu0 %v1197
    %1390 = vmatpush.msra.mxu0 %v1196
    %1391 = vmatpush.msra.mxu0 %v1195
    %1392 = vmatpush.msra.mxu0 %v1194
    %1393 = vmatpush.msra.mxu0 %v1193
    %1394 = vmatpush.msra.mxu0 %v1192
    %1395 = vmatpush.msra.mxu0 %v1191
    %1396 = vmatpush.msra.mxu0 %v1190
    %1397 = vmatmul.f32.gmra.mxu0 %v1343
    %v1398 = vpop.f32.mrf.mxu0
    %v1399 = vadd.f32 %v1376, %v1398
    %1400 = vmatmul.f32.gmra.mxu0 %v1351
    %v1401 = vpop.f32.mrf.mxu0
    %v1402 = vadd.f32 %v1379, %v1401
    %1403 = vdwg.mxu0
    %1404 = vmatpush.msra.mxu0 %v1221
    %1405 = vmatpush.msra.mxu0 %v1220
    %1406 = vmatpush.msra.mxu0 %v1219
    %1407 = vmatpush.msra.mxu0 %v1218
    %1408 = vmatpush.msra.mxu0 %v1217
    %1409 = vmatpush.msra.mxu0 %v1216
    %1410 = vmatpush.msra.mxu0 %v1215
    %1411 = vmatpush.msra.mxu0 %v1214
    %1412 = vmatpush.msra.mxu0 %v1213
    %1413 = vmatpush.msra.mxu0 %v1212
    %1414 = vmatpush.msra.mxu0 %v1211
    %1415 = vmatpush.msra.mxu0 %v1210
    %1416 = vmatpush.msra.mxu0 %v1209
    %1417 = vmatpush.msra.mxu0 %v1208
    %1418 = vmatpush.msra.mxu0 %v1207
    %1419 = vmatpush.msra.mxu0 %v1206
    %1420 = vmatmul.f32.gmra.mxu0 %v1344
    %v1421 = vpop.f32.mrf.mxu0
    %v1422 = vadd.f32 %v1399, %v1421
    %1423 = vmatmul.f32.gmra.mxu0 %v1352
    %v1424 = vpop.f32.mrf.mxu0
    %v1425 = vadd.f32 %v1402, %v1424
    %1426 = vdwg.mxu0
    %1427 = vmatpush.msra.mxu0 %v1237
    %1428 = vmatpush.msra.mxu0 %v1236
    %1429 = vmatpush.msra.mxu0 %v1235
    %1430 = vmatpush.msra.mxu0 %v1234
    %1431 = vmatpush.msra.mxu0 %v1233
    %1432 = vmatpush.msra.mxu0 %v1232
    %1433 = vmatpush.msra.mxu0 %v1231
    %1434 = vmatpush.msra.mxu0 %v1230
    %1435 = vmatpush.msra.mxu0 %v1229
    %1436 = vmatpush.msra.mxu0 %v1228
    %1437 = vmatpush.msra.mxu0 %v1227
    %1438 = vmatpush.msra.mxu0 %v1226
    %1439 = vmatpush.msra.mxu0 %v1225
    %1440 = vmatpush.msra.mxu0 %v1224
    %1441 = vmatpush.msra.mxu0 %v1223
    %1442 = vmatpush.msra.mxu0 %v1222
    %1443 = vmatmul.f32.gmra.mxu0 %v1345
    %v1444 = vpop.f32.mrf.mxu0
    %v1445 = vadd.f32 %v1422, %v1444
    %1446 = vmatmul.f32.gmra.mxu0 %v1353
    %v1447 = vpop.f32.mrf.mxu0
    %v1448 = vadd.f32 %v1425, %v1447
    %1449 = vdwg.mxu0
    %1450 = vmatpush.msra.mxu0 %v1253
    %1451 = vmatpush.msra.mxu0 %v1252
    %1452 = vmatpush.msra.mxu0 %v1251
    %1453 = vmatpush.msra.mxu0 %v1250
    %1454 = vmatpush.msra.mxu0 %v1249
    %1455 = vmatpush.msra.mxu0 %v1248
    %1456 = vmatpush.msra.mxu0 %v1247
    %1457 = vmatpush.msra.mxu0 %v1246
    %1458 = vmatpush.msra.mxu0 %v1245
    %1459 = vmatpush.msra.mxu0 %v1244
    %1460 = vmatpush.msra.mxu0 %v1243
    %1461 = vmatpush.msra.mxu0 %v1242
    %1462 = vmatpush.msra.mxu0 %v1241
    %1463 = vmatpush.msra.mxu0 %v1240
    %1464 = vmatpush.msra.mxu0 %v1239
    %1465 = vmatpush.msra.mxu0 %v1238
    %1466 = vmatmul.f32.gmra.mxu0 %v1346
    %v1467 = vpop.f32.mrf.mxu0
    %v1468 = vadd.f32 %v1445, %v1467
    %1469 = vmatmul.f32.gmra.mxu0 %v1354
    %v1470 = vpop.f32.mrf.mxu0
    %v1471 = vadd.f32 %v1448, %v1470
    %1472 = vdwg.mxu0
    %1473 = vmatpush.msra.mxu0 %v1269
    %1474 = vmatpush.msra.mxu0 %v1268
    %1475 = vmatpush.msra.mxu0 %v1267
    %1476 = vmatpush.msra.mxu0 %v1266
    %1477 = vmatpush.msra.mxu0 %v1265
    %1478 = vmatpush.msra.mxu0 %v1264
    %1479 = vmatpush.msra.mxu0 %v1263
    %1480 = vmatpush.msra.mxu0 %v1262
    %1481 = vmatpush.msra.mxu0 %v1261
    %1482 = vmatpush.msra.mxu0 %v1260
    %1483 = vmatpush.msra.mxu0 %v1259
    %1484 = vmatpush.msra.mxu0 %v1258
    %1485 = vmatpush.msra.mxu0 %v1257
    %1486 = vmatpush.msra.mxu0 %v1256
    %1487 = vmatpush.msra.mxu0 %v1255
    %1488 = vmatpush.msra.mxu0 %v1254
    %1489 = vmatmul.f32.gmra.mxu0 %v1347
    %v1490 = vpop.f32.mrf.mxu0
    %v1491 = vadd.f32 %v1468, %v1490
    %1492 = vmatmul.f32.gmra.mxu0 %v1355
    %v1493 = vpop.f32.mrf.mxu0
    %v1494 = vadd.f32 %v1471, %v1493
    %1495 = vdwg.mxu0
    %1496 = vmatpush.msra.mxu0 %v1285
    %1497 = vmatpush.msra.mxu0 %v1284
    %1498 = vmatpush.msra.mxu0 %v1283
    %1499 = vmatpush.msra.mxu0 %v1282
    %1500 = vmatpush.msra.mxu0 %v1281
    %1501 = vmatpush.msra.mxu0 %v1280
    %1502 = vmatpush.msra.mxu0 %v1279
    %1503 = vmatpush.msra.mxu0 %v1278
    %1504 = vmatpush.msra.mxu0 %v1277
    %1505 = vmatpush.msra.mxu0 %v1276
    %1506 = vmatpush.msra.mxu0 %v1275
    %1507 = vmatpush.msra.mxu0 %v1274
    %1508 = vmatpush.msra.mxu0 %v1273
    %1509 = vmatpush.msra.mxu0 %v1272
    %1510 = vmatpush.msra.mxu0 %v1271
    %1511 = vmatpush.msra.mxu0 %v1270
    %1512 = vmatmul.f32.gmra.mxu0 %v1348
    %v1513 = vpop.f32.mrf.mxu0
    %v1514 = vadd.f32 %v1491, %v1513
    %1515 = vmatmul.f32.gmra.mxu0 %v1356
    %v1516 = vpop.f32.mrf.mxu0
    %v1517 = vadd.f32 %v1494, %v1516
    %1518 = vdwg.mxu0
    %1519 = vmatpush.msra.mxu0 %v1301
    %1520 = vmatpush.msra.mxu0 %v1300
    %1521 = vmatpush.msra.mxu0 %v1299
    %1522 = vmatpush.msra.mxu0 %v1298
    %1523 = vmatpush.msra.mxu0 %v1297
    %1524 = vmatpush.msra.mxu0 %v1296
    %1525 = vmatpush.msra.mxu0 %v1295
    %1526 = vmatpush.msra.mxu0 %v1294
    %1527 = vmatpush.msra.mxu0 %v1293
    %1528 = vmatpush.msra.mxu0 %v1292
    %1529 = vmatpush.msra.mxu0 %v1291
    %1530 = vmatpush.msra.mxu0 %v1290
    %1531 = vmatpush.msra.mxu0 %v1289
    %1532 = vmatpush.msra.mxu0 %v1288
    %1533 = vmatpush.msra.mxu0 %v1287
    %1534 = vmatpush.msra.mxu0 %v1286
    %1535 = vmatmul.f32.gmra.mxu0 %v1349
    %v1536 = vpop.f32.mrf.mxu0
    %v1537 = vadd.f32 %v1514, %v1536
    %1538 = vmatmul.f32.gmra.mxu0 %v1357
    %v1539 = vpop.f32.mrf.mxu0
    %v1540 = vadd.f32 %v1517, %v1539
    %1541 = vdwg.mxu0
    %1544 = vrot.lane.b32.xlu0 %v1537, 24
    %v1545 = vpop.permute.xlu0 %1544
    %1546 = vrot.lane.b32.xlu0 %v1540, 24
    %v1547 = vpop.permute.xlu0 %1546
    %vm1550 = vcmask 261312
    %1551 = vst.msk [vmem:[#allocation2] sm:$0xff] %vm1550, %v1545
    %1552 = vst.msk [vmem:[#allocation2 + $0x8] sm:$0xff] %vm1550, %v1547
    %v1553 = vld [vmem:[%s6] sm:$0xff]
    %v1554 = vld [vmem:[%s6 + $0x8] sm:$0xff]
    %v1555 = vld [vmem:[%s6 + $0x10] sm:$0xff]
    %v1556 = vld [vmem:[%s6 + $0x18] sm:$0xff]
    %v1557 = vld [vmem:[%s6 + $0x20] sm:$0xff]
    %v1558 = vld [vmem:[%s6 + $0x28] sm:$0xff]
    %v1559 = vld [vmem:[%s6 + $0x30] sm:$0xff]
    %v1560 = vld [vmem:[%s6 + $0x38] sm:$0xff]
    %v1561 = vld [vmem:[%s6 + $0x40] sm:$0xff]
    %v1562 = vld [vmem:[%s6 + $0x48] sm:$0xff]
    %v1563 = vld [vmem:[%s6 + $0x50] sm:$0xff]
    %v1564 = vld [vmem:[%s6 + $0x58] sm:$0xff]
    %v1565 = vld [vmem:[%s6 + $0x60] sm:$0xff]
    %v1566 = vld [vmem:[%s6 + $0x68] sm:$0xff]
    %v1567 = vld [vmem:[%s6 + $0x70] sm:$0xff]
    %v1568 = vld [vmem:[%s6 + $0x78] sm:$0xff]
    %v1569 = vld [vmem:[%s6 + $0x80] sm:$0xff]
    %v1570 = vld [vmem:[%s6 + $0x88] sm:$0xff]
    %v1571 = vld [vmem:[%s6 + $0x90] sm:$0xff]
    %v1572 = vld [vmem:[%s6 + $0x98] sm:$0xff]
    %v1573 = vld [vmem:[%s6 + $0xa0] sm:$0xff]
    %v1574 = vld [vmem:[%s6 + $0xa8] sm:$0xff]
    %v1575 = vld [vmem:[%s6 + $0xb0] sm:$0xff]
    %v1576 = vld [vmem:[%s6 + $0xb8] sm:$0xff]
    %v1577 = vld [vmem:[%s6 + $0xc0] sm:$0xff]
    %v1578 = vld [vmem:[%s6 + $0xc8] sm:$0xff]
    %v1579 = vld [vmem:[%s6 + $0xd0] sm:$0xff]
    %v1580 = vld [vmem:[%s6 + $0xd8] sm:$0xff]
    %v1581 = vld [vmem:[%s6 + $0xe0] sm:$0xff]
    %v1582 = vld [vmem:[%s6 + $0xe8] sm:$0xff]
    %v1583 = vld [vmem:[%s6 + $0xf0] sm:$0xff]
    %v1584 = vld [vmem:[%s6 + $0xf8] sm:$0xff]
    %v1585 = vld [vmem:[%s6 + $0x100] sm:$0xff]
    %v1586 = vld [vmem:[%s6 + $0x108] sm:$0xff]
    %v1587 = vld [vmem:[%s6 + $0x110] sm:$0xff]
    %v1588 = vld [vmem:[%s6 + $0x118] sm:$0xff]
    %v1589 = vld [vmem:[%s6 + $0x120] sm:$0xff]
    %v1590 = vld [vmem:[%s6 + $0x128] sm:$0xff]
    %v1591 = vld [vmem:[%s6 + $0x130] sm:$0xff]
    %v1592 = vld [vmem:[%s6 + $0x138] sm:$0xff]
    %v1593 = vld [vmem:[%s6 + $0x140] sm:$0xff]
    %v1594 = vld [vmem:[%s6 + $0x148] sm:$0xff]
    %v1595 = vld [vmem:[%s6 + $0x150] sm:$0xff]
    %v1596 = vld [vmem:[%s6 + $0x158] sm:$0xff]
    %v1597 = vld [vmem:[%s6 + $0x160] sm:$0xff]
    %v1598 = vld [vmem:[%s6 + $0x168] sm:$0xff]
    %v1599 = vld [vmem:[%s6 + $0x170] sm:$0xff]
    %v1600 = vld [vmem:[%s6 + $0x178] sm:$0xff]
    %v1601 = vld [vmem:[%s6 + $0x180] sm:$0xff]
    %v1602 = vld [vmem:[%s6 + $0x188] sm:$0xff]
    %v1603 = vld [vmem:[%s6 + $0x190] sm:$0xff]
    %v1604 = vld [vmem:[%s6 + $0x198] sm:$0xff]
    %v1605 = vld [vmem:[%s6 + $0x1a0] sm:$0xff]
    %v1606 = vld [vmem:[%s6 + $0x1a8] sm:$0xff]
    %v1607 = vld [vmem:[%s6 + $0x1b0] sm:$0xff]
    %v1608 = vld [vmem:[%s6 + $0x1b8] sm:$0xff]
    %v1609 = vld [vmem:[%s6 + $0x1c0] sm:$0xff]
    %v1610 = vld [vmem:[%s6 + $0x1c8] sm:$0xff]
    %v1611 = vld [vmem:[%s6 + $0x1d0] sm:$0xff]
    %v1612 = vld [vmem:[%s6 + $0x1d8] sm:$0xff]
    %v1613 = vld [vmem:[%s6 + $0x1e0] sm:$0xff]
    %v1614 = vld [vmem:[%s6 + $0x1e8] sm:$0xff]
    %v1615 = vld [vmem:[%s6 + $0x1f0] sm:$0xff]
    %v1616 = vld [vmem:[%s6 + $0x1f8] sm:$0xff]
    %v1617 = vld [vmem:[%s6 + $0x200] sm:$0xff]
    %v1618 = vld [vmem:[%s6 + $0x208] sm:$0xff]
    %v1619 = vld [vmem:[%s6 + $0x210] sm:$0xff]
    %v1620 = vld [vmem:[%s6 + $0x218] sm:$0xff]
    %v1621 = vld [vmem:[%s6 + $0x220] sm:$0xff]
    %v1622 = vld [vmem:[%s6 + $0x228] sm:$0xff]
    %v1623 = vld [vmem:[%s6 + $0x230] sm:$0xff]
    %v1624 = vld [vmem:[%s6 + $0x238] sm:$0xff]
    %v1625 = vld [vmem:[%s6 + $0x240] sm:$0xff]
    %v1626 = vld [vmem:[%s6 + $0x248] sm:$0xff]
    %v1627 = vld [vmem:[%s6 + $0x250] sm:$0xff]
    %v1628 = vld [vmem:[%s6 + $0x258] sm:$0xff]
    %v1629 = vld [vmem:[%s6 + $0x260] sm:$0xff]
    %v1630 = vld [vmem:[%s6 + $0x268] sm:$0xff]
    %v1631 = vld [vmem:[%s6 + $0x270] sm:$0xff]
    %v1632 = vld [vmem:[%s6 + $0x278] sm:$0xff]
    %v1633 = vld [vmem:[%s6 + $0x280] sm:$0xff]
    %v1634 = vld [vmem:[%s6 + $0x288] sm:$0xff]
    %v1635 = vld [vmem:[%s6 + $0x290] sm:$0xff]
    %v1636 = vld [vmem:[%s6 + $0x298] sm:$0xff]
    %v1637 = vld [vmem:[%s6 + $0x2a0] sm:$0xff]
    %v1638 = vld [vmem:[%s6 + $0x2a8] sm:$0xff]
    %v1639 = vld [vmem:[%s6 + $0x2b0] sm:$0xff]
    %v1640 = vld [vmem:[%s6 + $0x2b8] sm:$0xff]
    %v1641 = vld [vmem:[%s6 + $0x2c0] sm:$0xff]
    %v1642 = vld [vmem:[%s6 + $0x2c8] sm:$0xff]
    %v1643 = vld [vmem:[%s6 + $0x2d0] sm:$0xff]
    %v1644 = vld [vmem:[%s6 + $0x2d8] sm:$0xff]
    %v1645 = vld [vmem:[%s6 + $0x2e0] sm:$0xff]
    %v1646 = vld [vmem:[%s6 + $0x2e8] sm:$0xff]
    %v1647 = vld [vmem:[%s6 + $0x2f0] sm:$0xff]
    %v1648 = vld [vmem:[%s6 + $0x2f8] sm:$0xff]
    %v1649 = vld [vmem:[%s6 + $0x300] sm:$0xff]
    %v1650 = vld [vmem:[%s6 + $0x308] sm:$0xff]
    %v1651 = vld [vmem:[%s6 + $0x310] sm:$0xff]
    %v1652 = vld [vmem:[%s6 + $0x318] sm:$0xff]
    %v1653 = vld [vmem:[%s6 + $0x320] sm:$0xff]
    %v1654 = vld [vmem:[%s6 + $0x328] sm:$0xff]
    %v1655 = vld [vmem:[%s6 + $0x330] sm:$0xff]
    %v1656 = vld [vmem:[%s6 + $0x338] sm:$0xff]
    %v1657 = vld [vmem:[%s6 + $0x340] sm:$0xff]
    %v1658 = vld [vmem:[%s6 + $0x348] sm:$0xff]
    %v1659 = vld [vmem:[%s6 + $0x350] sm:$0xff]
    %v1660 = vld [vmem:[%s6 + $0x358] sm:$0xff]
    %v1661 = vld [vmem:[%s6 + $0x360] sm:$0xff]
    %v1662 = vld [vmem:[%s6 + $0x368] sm:$0xff]
    %v1663 = vld [vmem:[%s6 + $0x370] sm:$0xff]
    %v1664 = vld [vmem:[%s6 + $0x378] sm:$0xff]
    %v1665 = vld [vmem:[%s6 + $0x380] sm:$0xff]
    %v1666 = vld [vmem:[%s6 + $0x388] sm:$0xff]
    %v1667 = vld [vmem:[%s6 + $0x390] sm:$0xff]
    %v1668 = vld [vmem:[%s6 + $0x398] sm:$0xff]
    %v1669 = vld [vmem:[%s6 + $0x3a0] sm:$0xff]
    %v1670 = vld [vmem:[%s6 + $0x3a8] sm:$0xff]
    %v1671 = vld [vmem:[%s6 + $0x3b0] sm:$0xff]
    %v1672 = vld [vmem:[%s6 + $0x3b8] sm:$0xff]
    %v1673 = vld [vmem:[%s6 + $0x3c0] sm:$0xff]
    %v1674 = vld [vmem:[%s6 + $0x3c8] sm:$0xff]
    %v1675 = vld [vmem:[%s6 + $0x3d0] sm:$0xff]
    %v1676 = vld [vmem:[%s6 + $0x3d8] sm:$0xff]
    %v1677 = vld [vmem:[%s6 + $0x3e0] sm:$0xff]
    %v1678 = vld [vmem:[%s6 + $0x3e8] sm:$0xff]
    %v1679 = vld [vmem:[%s6 + $0x3f0] sm:$0xff]
    %v1680 = vld [vmem:[%s6 + $0x3f8] sm:$0xff]
    %v1681 = vld [vmem:[%s0] sm:$0xff]
    %v1682 = vld [vmem:[%s0 + $0x8] sm:$0xff]
    %1683 = vset.pattern.permute.xlu0 6
    %1684 = vperm.xlu0 %1683, %v1681
    %v1685 = vpop.permute.xlu0 %1684
    %1686 = vset.pattern.permute.xlu0 6
    %1687 = vperm.xlu0 %1686, %v1682
    %v1688 = vpop.permute.xlu0 %1687
    %vm1689 = vcmp.eq.s32.totalorder %v1685, %v167
    %vm1690 = vcmp.eq.s32.totalorder %v1685, %v168
    %vm1691 = vcmp.eq.s32.totalorder %v1685, %v169
    %vm1692 = vcmp.eq.s32.totalorder %v1685, %v170
    %vm1693 = vcmp.eq.s32.totalorder %v1685, %v171
    %vm1694 = vcmp.eq.s32.totalorder %v1685, %v172
    %vm1695 = vcmp.eq.s32.totalorder %v1685, %v173
    %vm1696 = vcmp.eq.s32.totalorder %v1685, %v174
    %vm1697 = vcmp.eq.s32.totalorder %v1688, %v167
    %vm1698 = vcmp.eq.s32.totalorder %v1688, %v168
    %vm1699 = vcmp.eq.s32.totalorder %v1688, %v169
    %vm1700 = vcmp.eq.s32.totalorder %v1688, %v170
    %vm1701 = vcmp.eq.s32.totalorder %v1688, %v171
    %vm1702 = vcmp.eq.s32.totalorder %v1688, %v172
    %vm1703 = vcmp.eq.s32.totalorder %v1688, %v173
    %vm1704 = vcmp.eq.s32.totalorder %v1688, %v174
    %v1705 = vsel %vm1689, 1, 0
    %v1706 = vsel %vm1690, 1, 0
    %v1707 = vsel %vm1691, 1, 0
    %v1708 = vsel %vm1692, 1, 0
    %v1709 = vsel %vm1693, 1, 0
    %v1710 = vsel %vm1694, 1, 0
    %v1711 = vsel %vm1695, 1, 0
    %v1712 = vsel %vm1696, 1, 0
    %v1713 = vsel %vm1697, 1, 0
    %v1714 = vsel %vm1698, 1, 0
    %v1715 = vsel %vm1699, 1, 0
    %v1716 = vsel %vm1700, 1, 0
    %v1717 = vsel %vm1701, 1, 0
    %v1718 = vsel %vm1702, 1, 0
    %v1719 = vsel %vm1703, 1, 0
    %v1720 = vsel %vm1704, 1, 0
    %v1721 = vcvt.s32.f32 %v1705
    %v1722 = vcvt.s32.f32 %v1706
    %v1723 = vcvt.s32.f32 %v1707
    %v1724 = vcvt.s32.f32 %v1708
    %v1725 = vcvt.s32.f32 %v1709
    %v1726 = vcvt.s32.f32 %v1710
    %v1727 = vcvt.s32.f32 %v1711
    %v1728 = vcvt.s32.f32 %v1712
    %v1729 = vcvt.s32.f32 %v1713
    %v1730 = vcvt.s32.f32 %v1714
    %v1731 = vcvt.s32.f32 %v1715
    %v1732 = vcvt.s32.f32 %v1716
    %v1733 = vcvt.s32.f32 %v1717
    %v1734 = vcvt.s32.f32 %v1718
    %v1735 = vcvt.s32.f32 %v1719
    %v1736 = vcvt.s32.f32 %v1720
    %1737 = vmatpush.msra.mxu0 %v1568
    %1738 = vmatpush.msra.mxu0 %v1567
    %1739 = vmatpush.msra.mxu0 %v1566
    %1740 = vmatpush.msra.mxu0 %v1565
    %1741 = vmatpush.msra.mxu0 %v1564
    %1742 = vmatpush.msra.mxu0 %v1563
    %1743 = vmatpush.msra.mxu0 %v1562
    %1744 = vmatpush.msra.mxu0 %v1561
    %1745 = vmatpush.msra.mxu0 %v1560
    %1746 = vmatpush.msra.mxu0 %v1559
    %1747 = vmatpush.msra.mxu0 %v1558
    %1748 = vmatpush.msra.mxu0 %v1557
    %1749 = vmatpush.msra.mxu0 %v1556
    %1750 = vmatpush.msra.mxu0 %v1555
    %1751 = vmatpush.msra.mxu0 %v1554
    %1752 = vmatpush.msra.mxu0 %v1553
    %1753 = vmatmul.f32.gmra.mxu0 %v1721
    %v1754 = vpop.f32.mrf.mxu0
    %v1755 = vadd.f32 0.0, %v1754
    %1756 = vmatmul.f32.gmra.mxu0 %v1729
    %v1757 = vpop.f32.mrf.mxu0
    %v1758 = vadd.f32 0.0, %v1757
    %1759 = vdwg.mxu0
    %1760 = vmatpush.msra.mxu0 %v1584
    %1761 = vmatpush.msra.mxu0 %v1583
    %1762 = vmatpush.msra.mxu0 %v1582
    %1763 = vmatpush.msra.mxu0 %v1581
    %1764 = vmatpush.msra.mxu0 %v1580
    %1765 = vmatpush.msra.mxu0 %v1579
    %1766 = vmatpush.msra.mxu0 %v1578
    %1767 = vmatpush.msra.mxu0 %v1577
    %1768 = vmatpush.msra.mxu0 %v1576
    %1769 = vmatpush.msra.mxu0 %v1575
    %1770 = vmatpush.msra.mxu0 %v1574
    %1771 = vmatpush.msra.mxu0 %v1573
    %1772 = vmatpush.msra.mxu0 %v1572
    %1773 = vmatpush.msra.mxu0 %v1571
    %1774 = vmatpush.msra.mxu0 %v1570
    %1775 = vmatpush.msra.mxu0 %v1569
    %1776 = vmatmul.f32.gmra.mxu0 %v1722
    %v1777 = vpop.f32.mrf.mxu0
    %v1778 = vadd.f32 %v1755, %v1777
    %1779 = vmatmul.f32.gmra.mxu0 %v1730
    %v1780 = vpop.f32.mrf.mxu0
    %v1781 = vadd.f32 %v1758, %v1780
    %1782 = vdwg.mxu0
    %1783 = vmatpush.msra.mxu0 %v1600
    %1784 = vmatpush.msra.mxu0 %v1599
    %1785 = vmatpush.msra.mxu0 %v1598
    %1786 = vmatpush.msra.mxu0 %v1597
    %1787 = vmatpush.msra.mxu0 %v1596
    %1788 = vmatpush.msra.mxu0 %v1595
    %1789 = vmatpush.msra.mxu0 %v1594
    %1790 = vmatpush.msra.mxu0 %v1593
    %1791 = vmatpush.msra.mxu0 %v1592
    %1792 = vmatpush.msra.mxu0 %v1591
    %1793 = vmatpush.msra.mxu0 %v1590
    %1794 = vmatpush.msra.mxu0 %v1589
    %1795 = vmatpush.msra.mxu0 %v1588
    %1796 = vmatpush.msra.mxu0 %v1587
    %1797 = vmatpush.msra.mxu0 %v1586
    %1798 = vmatpush.msra.mxu0 %v1585
    %1799 = vmatmul.f32.gmra.mxu0 %v1723
    %v1800 = vpop.f32.mrf.mxu0
    %v1801 = vadd.f32 %v1778, %v1800
    %1802 = vmatmul.f32.gmra.mxu0 %v1731
    %v1803 = vpop.f32.mrf.mxu0
    %v1804 = vadd.f32 %v1781, %v1803
    %1805 = vdwg.mxu0
    %1806 = vmatpush.msra.mxu0 %v1616
    %1807 = vmatpush.msra.mxu0 %v1615
    %1808 = vmatpush.msra.mxu0 %v1614
    %1809 = vmatpush.msra.mxu0 %v1613
    %1810 = vmatpush.msra.mxu0 %v1612
    %1811 = vmatpush.msra.mxu0 %v1611
    %1812 = vmatpush.msra.mxu0 %v1610
    %1813 = vmatpush.msra.mxu0 %v1609
    %1814 = vmatpush.msra.mxu0 %v1608
    %1815 = vmatpush.msra.mxu0 %v1607
    %1816 = vmatpush.msra.mxu0 %v1606
    %1817 = vmatpush.msra.mxu0 %v1605
    %1818 = vmatpush.msra.mxu0 %v1604
    %1819 = vmatpush.msra.mxu0 %v1603
    %1820 = vmatpush.msra.mxu0 %v1602
    %1821 = vmatpush.msra.mxu0 %v1601
    %1822 = vmatmul.f32.gmra.mxu0 %v1724
    %v1823 = vpop.f32.mrf.mxu0
    %v1824 = vadd.f32 %v1801, %v1823
    %1825 = vmatmul.f32.gmra.mxu0 %v1732
    %v1826 = vpop.f32.mrf.mxu0
    %v1827 = vadd.f32 %v1804, %v1826
    %1828 = vdwg.mxu0
    %1829 = vmatpush.msra.mxu0 %v1632
    %1830 = vmatpush.msra.mxu0 %v1631
    %1831 = vmatpush.msra.mxu0 %v1630
    %1832 = vmatpush.msra.mxu0 %v1629
    %1833 = vmatpush.msra.mxu0 %v1628
    %1834 = vmatpush.msra.mxu0 %v1627
    %1835 = vmatpush.msra.mxu0 %v1626
    %1836 = vmatpush.msra.mxu0 %v1625
    %1837 = vmatpush.msra.mxu0 %v1624
    %1838 = vmatpush.msra.mxu0 %v1623
    %1839 = vmatpush.msra.mxu0 %v1622
    %1840 = vmatpush.msra.mxu0 %v1621
    %1841 = vmatpush.msra.mxu0 %v1620
    %1842 = vmatpush.msra.mxu0 %v1619
    %1843 = vmatpush.msra.mxu0 %v1618
    %1844 = vmatpush.msra.mxu0 %v1617
    %1845 = vmatmul.f32.gmra.mxu0 %v1725
    %v1846 = vpop.f32.mrf.mxu0
    %v1847 = vadd.f32 %v1824, %v1846
    %1848 = vmatmul.f32.gmra.mxu0 %v1733
    %v1849 = vpop.f32.mrf.mxu0
    %v1850 = vadd.f32 %v1827, %v1849
    %1851 = vdwg.mxu0
    %1852 = vmatpush.msra.mxu0 %v1648
    %1853 = vmatpush.msra.mxu0 %v1647
    %1854 = vmatpush.msra.mxu0 %v1646
    %1855 = vmatpush.msra.mxu0 %v1645
    %1856 = vmatpush.msra.mxu0 %v1644
    %1857 = vmatpush.msra.mxu0 %v1643
    %1858 = vmatpush.msra.mxu0 %v1642
    %1859 = vmatpush.msra.mxu0 %v1641
    %1860 = vmatpush.msra.mxu0 %v1640
    %1861 = vmatpush.msra.mxu0 %v1639
    %1862 = vmatpush.msra.mxu0 %v1638
    %1863 = vmatpush.msra.mxu0 %v1637
    %1864 = vmatpush.msra.mxu0 %v1636
    %1865 = vmatpush.msra.mxu0 %v1635
    %1866 = vmatpush.msra.mxu0 %v1634
    %1867 = vmatpush.msra.mxu0 %v1633
    %1868 = vmatmul.f32.gmra.mxu0 %v1726
    %v1869 = vpop.f32.mrf.mxu0
    %v1870 = vadd.f32 %v1847, %v1869
    %1871 = vmatmul.f32.gmra.mxu0 %v1734
    %v1872 = vpop.f32.mrf.mxu0
    %v1873 = vadd.f32 %v1850, %v1872
    %1874 = vdwg.mxu0
    %1875 = vmatpush.msra.mxu0 %v1664
    %1876 = vmatpush.msra.mxu0 %v1663
    %1877 = vmatpush.msra.mxu0 %v1662
    %1878 = vmatpush.msra.mxu0 %v1661
    %1879 = vmatpush.msra.mxu0 %v1660
    %1880 = vmatpush.msra.mxu0 %v1659
    %1881 = vmatpush.msra.mxu0 %v1658
    %1882 = vmatpush.msra.mxu0 %v1657
    %1883 = vmatpush.msra.mxu0 %v1656
    %1884 = vmatpush.msra.mxu0 %v1655
    %1885 = vmatpush.msra.mxu0 %v1654
    %1886 = vmatpush.msra.mxu0 %v1653
    %1887 = vmatpush.msra.mxu0 %v1652
    %1888 = vmatpush.msra.mxu0 %v1651
    %1889 = vmatpush.msra.mxu0 %v1650
    %1890 = vmatpush.msra.mxu0 %v1649
    %1891 = vmatmul.f32.gmra.mxu0 %v1727
    %v1892 = vpop.f32.mrf.mxu0
    %v1893 = vadd.f32 %v1870, %v1892
    %1894 = vmatmul.f32.gmra.mxu0 %v1735
    %v1895 = vpop.f32.mrf.mxu0
    %v1896 = vadd.f32 %v1873, %v1895
    %1897 = vdwg.mxu0
    %1898 = vmatpush.msra.mxu0 %v1680
    %1899 = vmatpush.msra.mxu0 %v1679
    %1900 = vmatpush.msra.mxu0 %v1678
    %1901 = vmatpush.msra.mxu0 %v1677
    %1902 = vmatpush.msra.mxu0 %v1676
    %1903 = vmatpush.msra.mxu0 %v1675
    %1904 = vmatpush.msra.mxu0 %v1674
    %1905 = vmatpush.msra.mxu0 %v1673
    %1906 = vmatpush.msra.mxu0 %v1672
    %1907 = vmatpush.msra.mxu0 %v1671
    %1908 = vmatpush.msra.mxu0 %v1670
    %1909 = vmatpush.msra.mxu0 %v1669
    %1910 = vmatpush.msra.mxu0 %v1668
    %1911 = vmatpush.msra.mxu0 %v1667
    %1912 = vmatpush.msra.mxu0 %v1666
    %1913 = vmatpush.msra.mxu0 %v1665
    %1914 = vmatmul.f32.gmra.mxu0 %v1728
    %v1915 = vpop.f32.mrf.mxu0
    %v1916 = vadd.f32 %v1893, %v1915
    %1917 = vmatmul.f32.gmra.mxu0 %v1736
    %v1918 = vpop.f32.mrf.mxu0
    %v1919 = vadd.f32 %v1896, %v1918
    %1920 = vdwg.mxu0
    %1923 = vrot.lane.b32.xlu0 %v1916, 32
    %v1924 = vpop.permute.xlu0 %1923
    %1925 = vrot.lane.b32.xlu0 %v1919, 32
    %v1926 = vpop.permute.xlu0 %1925
    %vm1929 = vcmask 326912
    %1930 = vst.msk [vmem:[#allocation2] sm:$0xff] %vm1929, %v1924
    %1931 = vst.msk [vmem:[#allocation2 + $0x8] sm:$0xff] %vm1929, %v1926
    %v1932 = vld [vmem:[%s7] sm:$0xff]
    %v1933 = vld [vmem:[%s7 + $0x8] sm:$0xff]
    %v1934 = vld [vmem:[%s7 + $0x10] sm:$0xff]
    %v1935 = vld [vmem:[%s7 + $0x18] sm:$0xff]
    %v1936 = vld [vmem:[%s7 + $0x20] sm:$0xff]
    %v1937 = vld [vmem:[%s7 + $0x28] sm:$0xff]
    %v1938 = vld [vmem:[%s7 + $0x30] sm:$0xff]
    %v1939 = vld [vmem:[%s7 + $0x38] sm:$0xff]
    %v1940 = vld [vmem:[%s7 + $0x40] sm:$0xff]
    %v1941 = vld [vmem:[%s7 + $0x48] sm:$0xff]
    %v1942 = vld [vmem:[%s7 + $0x50] sm:$0xff]
    %v1943 = vld [vmem:[%s7 + $0x58] sm:$0xff]
    %v1944 = vld [vmem:[%s7 + $0x60] sm:$0xff]
    %v1945 = vld [vmem:[%s7 + $0x68] sm:$0xff]
    %v1946 = vld [vmem:[%s7 + $0x70] sm:$0xff]
    %v1947 = vld [vmem:[%s7 + $0x78] sm:$0xff]
    %v1948 = vld [vmem:[%s7 + $0x80] sm:$0xff]
    %v1949 = vld [vmem:[%s7 + $0x88] sm:$0xff]
    %v1950 = vld [vmem:[%s7 + $0x90] sm:$0xff]
    %v1951 = vld [vmem:[%s7 + $0x98] sm:$0xff]
    %v1952 = vld [vmem:[%s7 + $0xa0] sm:$0xff]
    %v1953 = vld [vmem:[%s7 + $0xa8] sm:$0xff]
    %v1954 = vld [vmem:[%s7 + $0xb0] sm:$0xff]
    %v1955 = vld [vmem:[%s7 + $0xb8] sm:$0xff]
    %v1956 = vld [vmem:[%s7 + $0xc0] sm:$0xff]
    %v1957 = vld [vmem:[%s7 + $0xc8] sm:$0xff]
    %v1958 = vld [vmem:[%s7 + $0xd0] sm:$0xff]
    %v1959 = vld [vmem:[%s7 + $0xd8] sm:$0xff]
    %v1960 = vld [vmem:[%s7 + $0xe0] sm:$0xff]
    %v1961 = vld [vmem:[%s7 + $0xe8] sm:$0xff]
    %v1962 = vld [vmem:[%s7 + $0xf0] sm:$0xff]
    %v1963 = vld [vmem:[%s7 + $0xf8] sm:$0xff]
    %v1964 = vld [vmem:[%s7 + $0x100] sm:$0xff]
    %v1965 = vld [vmem:[%s7 + $0x108] sm:$0xff]
    %v1966 = vld [vmem:[%s7 + $0x110] sm:$0xff]
    %v1967 = vld [vmem:[%s7 + $0x118] sm:$0xff]
    %v1968 = vld [vmem:[%s7 + $0x120] sm:$0xff]
    %v1969 = vld [vmem:[%s7 + $0x128] sm:$0xff]
    %v1970 = vld [vmem:[%s7 + $0x130] sm:$0xff]
    %v1971 = vld [vmem:[%s7 + $0x138] sm:$0xff]
    %v1972 = vld [vmem:[%s7 + $0x140] sm:$0xff]
    %v1973 = vld [vmem:[%s7 + $0x148] sm:$0xff]
    %v1974 = vld [vmem:[%s7 + $0x150] sm:$0xff]
    %v1975 = vld [vmem:[%s7 + $0x158] sm:$0xff]
    %v1976 = vld [vmem:[%s7 + $0x160] sm:$0xff]
    %v1977 = vld [vmem:[%s7 + $0x168] sm:$0xff]
    %v1978 = vld [vmem:[%s7 + $0x170] sm:$0xff]
    %v1979 = vld [vmem:[%s7 + $0x178] sm:$0xff]
    %v1980 = vld [vmem:[%s7 + $0x180] sm:$0xff]
    %v1981 = vld [vmem:[%s7 + $0x188] sm:$0xff]
    %v1982 = vld [vmem:[%s7 + $0x190] sm:$0xff]
    %v1983 = vld [vmem:[%s7 + $0x198] sm:$0xff]
    %v1984 = vld [vmem:[%s7 + $0x1a0] sm:$0xff]
    %v1985 = vld [vmem:[%s7 + $0x1a8] sm:$0xff]
    %v1986 = vld [vmem:[%s7 + $0x1b0] sm:$0xff]
    %v1987 = vld [vmem:[%s7 + $0x1b8] sm:$0xff]
    %v1988 = vld [vmem:[%s7 + $0x1c0] sm:$0xff]
    %v1989 = vld [vmem:[%s7 + $0x1c8] sm:$0xff]
    %v1990 = vld [vmem:[%s7 + $0x1d0] sm:$0xff]
    %v1991 = vld [vmem:[%s7 + $0x1d8] sm:$0xff]
    %v1992 = vld [vmem:[%s7 + $0x1e0] sm:$0xff]
    %v1993 = vld [vmem:[%s7 + $0x1e8] sm:$0xff]
    %v1994 = vld [vmem:[%s7 + $0x1f0] sm:$0xff]
    %v1995 = vld [vmem:[%s7 + $0x1f8] sm:$0xff]
    %v1996 = vld [vmem:[%s7 + $0x200] sm:$0xff]
    %v1997 = vld [vmem:[%s7 + $0x208] sm:$0xff]
    %v1998 = vld [vmem:[%s7 + $0x210] sm:$0xff]
    %v1999 = vld [vmem:[%s7 + $0x218] sm:$0xff]
    %v2000 = vld [vmem:[%s7 + $0x220] sm:$0xff]
    %v2001 = vld [vmem:[%s7 + $0x228] sm:$0xff]
    %v2002 = vld [vmem:[%s7 + $0x230] sm:$0xff]
    %v2003 = vld [vmem:[%s7 + $0x238] sm:$0xff]
    %v2004 = vld [vmem:[%s7 + $0x240] sm:$0xff]
    %v2005 = vld [vmem:[%s7 + $0x248] sm:$0xff]
    %v2006 = vld [vmem:[%s7 + $0x250] sm:$0xff]
    %v2007 = vld [vmem:[%s7 + $0x258] sm:$0xff]
    %v2008 = vld [vmem:[%s7 + $0x260] sm:$0xff]
    %v2009 = vld [vmem:[%s7 + $0x268] sm:$0xff]
    %v2010 = vld [vmem:[%s7 + $0x270] sm:$0xff]
    %v2011 = vld [vmem:[%s7 + $0x278] sm:$0xff]
    %v2012 = vld [vmem:[%s7 + $0x280] sm:$0xff]
    %v2013 = vld [vmem:[%s7 + $0x288] sm:$0xff]
    %v2014 = vld [vmem:[%s7 + $0x290] sm:$0xff]
    %v2015 = vld [vmem:[%s7 + $0x298] sm:$0xff]
    %v2016 = vld [vmem:[%s7 + $0x2a0] sm:$0xff]
    %v2017 = vld [vmem:[%s7 + $0x2a8] sm:$0xff]
    %v2018 = vld [vmem:[%s7 + $0x2b0] sm:$0xff]
    %v2019 = vld [vmem:[%s7 + $0x2b8] sm:$0xff]
    %v2020 = vld [vmem:[%s7 + $0x2c0] sm:$0xff]
    %v2021 = vld [vmem:[%s7 + $0x2c8] sm:$0xff]
    %v2022 = vld [vmem:[%s7 + $0x2d0] sm:$0xff]
    %v2023 = vld [vmem:[%s7 + $0x2d8] sm:$0xff]
    %v2024 = vld [vmem:[%s7 + $0x2e0] sm:$0xff]
    %v2025 = vld [vmem:[%s7 + $0x2e8] sm:$0xff]
    %v2026 = vld [vmem:[%s7 + $0x2f0] sm:$0xff]
    %v2027 = vld [vmem:[%s7 + $0x2f8] sm:$0xff]
    %v2028 = vld [vmem:[%s7 + $0x300] sm:$0xff]
    %v2029 = vld [vmem:[%s7 + $0x308] sm:$0xff]
    %v2030 = vld [vmem:[%s7 + $0x310] sm:$0xff]
    %v2031 = vld [vmem:[%s7 + $0x318] sm:$0xff]
    %v2032 = vld [vmem:[%s7 + $0x320] sm:$0xff]
    %v2033 = vld [vmem:[%s7 + $0x328] sm:$0xff]
    %v2034 = vld [vmem:[%s7 + $0x330] sm:$0xff]
    %v2035 = vld [vmem:[%s7 + $0x338] sm:$0xff]
    %v2036 = vld [vmem:[%s7 + $0x340] sm:$0xff]
    %v2037 = vld [vmem:[%s7 + $0x348] sm:$0xff]
    %v2038 = vld [vmem:[%s7 + $0x350] sm:$0xff]
    %v2039 = vld [vmem:[%s7 + $0x358] sm:$0xff]
    %v2040 = vld [vmem:[%s7 + $0x360] sm:$0xff]
    %v2041 = vld [vmem:[%s7 + $0x368] sm:$0xff]
    %v2042 = vld [vmem:[%s7 + $0x370] sm:$0xff]
    %v2043 = vld [vmem:[%s7 + $0x378] sm:$0xff]
    %v2044 = vld [vmem:[%s7 + $0x380] sm:$0xff]
    %v2045 = vld [vmem:[%s7 + $0x388] sm:$0xff]
    %v2046 = vld [vmem:[%s7 + $0x390] sm:$0xff]
    %v2047 = vld [vmem:[%s7 + $0x398] sm:$0xff]
    %v2048 = vld [vmem:[%s7 + $0x3a0] sm:$0xff]
    %v2049 = vld [vmem:[%s7 + $0x3a8] sm:$0xff]
    %v2050 = vld [vmem:[%s7 + $0x3b0] sm:$0xff]
    %v2051 = vld [vmem:[%s7 + $0x3b8] sm:$0xff]
    %v2052 = vld [vmem:[%s7 + $0x3c0] sm:$0xff]
    %v2053 = vld [vmem:[%s7 + $0x3c8] sm:$0xff]
    %v2054 = vld [vmem:[%s7 + $0x3d0] sm:$0xff]
    %v2055 = vld [vmem:[%s7 + $0x3d8] sm:$0xff]
    %v2056 = vld [vmem:[%s7 + $0x3e0] sm:$0xff]
    %v2057 = vld [vmem:[%s7 + $0x3e8] sm:$0xff]
    %v2058 = vld [vmem:[%s7 + $0x3f0] sm:$0xff]
    %v2059 = vld [vmem:[%s7 + $0x3f8] sm:$0xff]
    %v2060 = vld [vmem:[%s0] sm:$0xff]
    %v2061 = vld [vmem:[%s0 + $0x8] sm:$0xff]
    %2062 = vset.pattern.permute.xlu0 7
    %2063 = vperm.xlu0 %2062, %v2060
    %v2064 = vpop.permute.xlu0 %2063
    %2065 = vset.pattern.permute.xlu0 7
    %2066 = vperm.xlu0 %2065, %v2061
    %v2067 = vpop.permute.xlu0 %2066
    %vm2068 = vcmp.eq.s32.totalorder %v2064, %v167
    %vm2069 = vcmp.eq.s32.totalorder %v2064, %v168
    %vm2070 = vcmp.eq.s32.totalorder %v2064, %v169
    %vm2071 = vcmp.eq.s32.totalorder %v2064, %v170
    %vm2072 = vcmp.eq.s32.totalorder %v2064, %v171
    %vm2073 = vcmp.eq.s32.totalorder %v2064, %v172
    %vm2074 = vcmp.eq.s32.totalorder %v2064, %v173
    %vm2075 = vcmp.eq.s32.totalorder %v2064, %v174
    %vm2076 = vcmp.eq.s32.totalorder %v2067, %v167
    %vm2077 = vcmp.eq.s32.totalorder %v2067, %v168
    %vm2078 = vcmp.eq.s32.totalorder %v2067, %v169
    %vm2079 = vcmp.eq.s32.totalorder %v2067, %v170
    %vm2080 = vcmp.eq.s32.totalorder %v2067, %v171
    %vm2081 = vcmp.eq.s32.totalorder %v2067, %v172
    %vm2082 = vcmp.eq.s32.totalorder %v2067, %v173
    %vm2083 = vcmp.eq.s32.totalorder %v2067, %v174
    %v2084 = vsel %vm2068, 1, 0
    %v2085 = vsel %vm2069, 1, 0
    %v2086 = vsel %vm2070, 1, 0
    %v2087 = vsel %vm2071, 1, 0
    %v2088 = vsel %vm2072, 1, 0
    %v2089 = vsel %vm2073, 1, 0
    %v2090 = vsel %vm2074, 1, 0
    %v2091 = vsel %vm2075, 1, 0
    %v2092 = vsel %vm2076, 1, 0
    %v2093 = vsel %vm2077, 1, 0
    %v2094 = vsel %vm2078, 1, 0
    %v2095 = vsel %vm2079, 1, 0
    %v2096 = vsel %vm2080, 1, 0
    %v2097 = vsel %vm2081, 1, 0
    %v2098 = vsel %vm2082, 1, 0
    %v2099 = vsel %vm2083, 1, 0
    %v2100 = vcvt.s32.f32 %v2084
    %v2101 = vcvt.s32.f32 %v2085
    %v2102 = vcvt.s32.f32 %v2086
    %v2103 = vcvt.s32.f32 %v2087
    %v2104 = vcvt.s32.f32 %v2088
    %v2105 = vcvt.s32.f32 %v2089
    %v2106 = vcvt.s32.f32 %v2090
    %v2107 = vcvt.s32.f32 %v2091
    %v2108 = vcvt.s32.f32 %v2092
    %v2109 = vcvt.s32.f32 %v2093
    %v2110 = vcvt.s32.f32 %v2094
    %v2111 = vcvt.s32.f32 %v2095
    %v2112 = vcvt.s32.f32 %v2096
    %v2113 = vcvt.s32.f32 %v2097
    %v2114 = vcvt.s32.f32 %v2098
    %v2115 = vcvt.s32.f32 %v2099
    %2116 = vmatpush.msra.mxu0 %v1947
    %2117 = vmatpush.msra.mxu0 %v1946
    %2118 = vmatpush.msra.mxu0 %v1945
    %2119 = vmatpush.msra.mxu0 %v1944
    %2120 = vmatpush.msra.mxu0 %v1943
    %2121 = vmatpush.msra.mxu0 %v1942
    %2122 = vmatpush.msra.mxu0 %v1941
    %2123 = vmatpush.msra.mxu0 %v1940
    %2124 = vmatpush.msra.mxu0 %v1939
    %2125 = vmatpush.msra.mxu0 %v1938
    %2126 = vmatpush.msra.mxu0 %v1937
    %2127 = vmatpush.msra.mxu0 %v1936
    %2128 = vmatpush.msra.mxu0 %v1935
    %2129 = vmatpush.msra.mxu0 %v1934
    %2130 = vmatpush.msra.mxu0 %v1933
    %2131 = vmatpush.msra.mxu0 %v1932
    %2132 = vmatmul.f32.gmra.mxu0 %v2100
    %v2133 = vpop.f32.mrf.mxu0
    %v2134 = vadd.f32 0.0, %v2133
    %2135 = vmatmul.f32.gmra.mxu0 %v2108
    %v2136 = vpop.f32.mrf.mxu0
    %v2137 = vadd.f32 0.0, %v2136
    %2138 = vdwg.mxu0
    %2139 = vmatpush.msra.mxu0 %v1963
    %2140 = vmatpush.msra.mxu0 %v1962
    %2141 = vmatpush.msra.mxu0 %v1961
    %2142 = vmatpush.msra.mxu0 %v1960
    %2143 = vmatpush.msra.mxu0 %v1959
    %2144 = vmatpush.msra.mxu0 %v1958
    %2145 = vmatpush.msra.mxu0 %v1957
    %2146 = vmatpush.msra.mxu0 %v1956
    %2147 = vmatpush.msra.mxu0 %v1955
    %2148 = vmatpush.msra.mxu0 %v1954
    %2149 = vmatpush.msra.mxu0 %v1953
    %2150 = vmatpush.msra.mxu0 %v1952
    %2151 = vmatpush.msra.mxu0 %v1951
    %2152 = vmatpush.msra.mxu0 %v1950
    %2153 = vmatpush.msra.mxu0 %v1949
    %2154 = vmatpush.msra.mxu0 %v1948
    %2155 = vmatmul.f32.gmra.mxu0 %v2101
    %v2156 = vpop.f32.mrf.mxu0
    %v2157 = vadd.f32 %v2134, %v2156
    %2158 = vmatmul.f32.gmra.mxu0 %v2109
    %v2159 = vpop.f32.mrf.mxu0
    %v2160 = vadd.f32 %v2137, %v2159
    %2161 = vdwg.mxu0
    %2162 = vmatpush.msra.mxu0 %v1979
    %2163 = vmatpush.msra.mxu0 %v1978
    %2164 = vmatpush.msra.mxu0 %v1977
    %2165 = vmatpush.msra.mxu0 %v1976
    %2166 = vmatpush.msra.mxu0 %v1975
    %2167 = vmatpush.msra.mxu0 %v1974
    %2168 = vmatpush.msra.mxu0 %v1973
    %2169 = vmatpush.msra.mxu0 %v1972
    %2170 = vmatpush.msra.mxu0 %v1971
    %2171 = vmatpush.msra.mxu0 %v1970
    %2172 = vmatpush.msra.mxu0 %v1969
    %2173 = vmatpush.msra.mxu0 %v1968
    %2174 = vmatpush.msra.mxu0 %v1967
    %2175 = vmatpush.msra.mxu0 %v1966
    %2176 = vmatpush.msra.mxu0 %v1965
    %2177 = vmatpush.msra.mxu0 %v1964
    %2178 = vmatmul.f32.gmra.mxu0 %v2102
    %v2179 = vpop.f32.mrf.mxu0
    %v2180 = vadd.f32 %v2157, %v2179
    %2181 = vmatmul.f32.gmra.mxu0 %v2110
    %v2182 = vpop.f32.mrf.mxu0
    %v2183 = vadd.f32 %v2160, %v2182
    %2184 = vdwg.mxu0
    %2185 = vmatpush.msra.mxu0 %v1995
    %2186 = vmatpush.msra.mxu0 %v1994
    %2187 = vmatpush.msra.mxu0 %v1993
    %2188 = vmatpush.msra.mxu0 %v1992
    %2189 = vmatpush.msra.mxu0 %v1991
    %2190 = vmatpush.msra.mxu0 %v1990
    %2191 = vmatpush.msra.mxu0 %v1989
    %2192 = vmatpush.msra.mxu0 %v1988
    %2193 = vmatpush.msra.mxu0 %v1987
    %2194 = vmatpush.msra.mxu0 %v1986
    %2195 = vmatpush.msra.mxu0 %v1985
    %2196 = vmatpush.msra.mxu0 %v1984
    %2197 = vmatpush.msra.mxu0 %v1983
    %2198 = vmatpush.msra.mxu0 %v1982
    %2199 = vmatpush.msra.mxu0 %v1981
    %2200 = vmatpush.msra.mxu0 %v1980
    %2201 = vmatmul.f32.gmra.mxu0 %v2103
    %v2202 = vpop.f32.mrf.mxu0
    %v2203 = vadd.f32 %v2180, %v2202
    %2204 = vmatmul.f32.gmra.mxu0 %v2111
    %v2205 = vpop.f32.mrf.mxu0
    %v2206 = vadd.f32 %v2183, %v2205
    %2207 = vdwg.mxu0
    %2208 = vmatpush.msra.mxu0 %v2011
    %2209 = vmatpush.msra.mxu0 %v2010
    %2210 = vmatpush.msra.mxu0 %v2009
    %2211 = vmatpush.msra.mxu0 %v2008
    %2212 = vmatpush.msra.mxu0 %v2007
    %2213 = vmatpush.msra.mxu0 %v2006
    %2214 = vmatpush.msra.mxu0 %v2005
    %2215 = vmatpush.msra.mxu0 %v2004
    %2216 = vmatpush.msra.mxu0 %v2003
    %2217 = vmatpush.msra.mxu0 %v2002
    %2218 = vmatpush.msra.mxu0 %v2001
    %2219 = vmatpush.msra.mxu0 %v2000
    %2220 = vmatpush.msra.mxu0 %v1999
    %2221 = vmatpush.msra.mxu0 %v1998
    %2222 = vmatpush.msra.mxu0 %v1997
    %2223 = vmatpush.msra.mxu0 %v1996
    %2224 = vmatmul.f32.gmra.mxu0 %v2104
    %v2225 = vpop.f32.mrf.mxu0
    %v2226 = vadd.f32 %v2203, %v2225
    %2227 = vmatmul.f32.gmra.mxu0 %v2112
    %v2228 = vpop.f32.mrf.mxu0
    %v2229 = vadd.f32 %v2206, %v2228
    %2230 = vdwg.mxu0
    %2231 = vmatpush.msra.mxu0 %v2027
    %2232 = vmatpush.msra.mxu0 %v2026
    %2233 = vmatpush.msra.mxu0 %v2025
    %2234 = vmatpush.msra.mxu0 %v2024
    %2235 = vmatpush.msra.mxu0 %v2023
    %2236 = vmatpush.msra.mxu0 %v2022
    %2237 = vmatpush.msra.mxu0 %v2021
    %2238 = vmatpush.msra.mxu0 %v2020
    %2239 = vmatpush.msra.mxu0 %v2019
    %2240 = vmatpush.msra.mxu0 %v2018
    %2241 = vmatpush.msra.mxu0 %v2017
    %2242 = vmatpush.msra.mxu0 %v2016
    %2243 = vmatpush.msra.mxu0 %v2015
    %2244 = vmatpush.msra.mxu0 %v2014
    %2245 = vmatpush.msra.mxu0 %v2013
    %2246 = vmatpush.msra.mxu0 %v2012
    %2247 = vmatmul.f32.gmra.mxu0 %v2105
    %v2248 = vpop.f32.mrf.mxu0
    %v2249 = vadd.f32 %v2226, %v2248
    %2250 = vmatmul.f32.gmra.mxu0 %v2113
    %v2251 = vpop.f32.mrf.mxu0
    %v2252 = vadd.f32 %v2229, %v2251
    %2253 = vdwg.mxu0
    %2254 = vmatpush.msra.mxu0 %v2043
    %2255 = vmatpush.msra.mxu0 %v2042
    %2256 = vmatpush.msra.mxu0 %v2041
    %2257 = vmatpush.msra.mxu0 %v2040
    %2258 = vmatpush.msra.mxu0 %v2039
    %2259 = vmatpush.msra.mxu0 %v2038
    %2260 = vmatpush.msra.mxu0 %v2037
    %2261 = vmatpush.msra.mxu0 %v2036
    %2262 = vmatpush.msra.mxu0 %v2035
    %2263 = vmatpush.msra.mxu0 %v2034
    %2264 = vmatpush.msra.mxu0 %v2033
    %2265 = vmatpush.msra.mxu0 %v2032
    %2266 = vmatpush.msra.mxu0 %v2031
    %2267 = vmatpush.msra.mxu0 %v2030
    %2268 = vmatpush.msra.mxu0 %v2029
    %2269 = vmatpush.msra.mxu0 %v2028
    %2270 = vmatmul.f32.gmra.mxu0 %v2106
    %v2271 = vpop.f32.mrf.mxu0
    %v2272 = vadd.f32 %v2249, %v2271
    %2273 = vmatmul.f32.gmra.mxu0 %v2114
    %v2274 = vpop.f32.mrf.mxu0
    %v2275 = vadd.f32 %v2252, %v2274
    %2276 = vdwg.mxu0
    %2277 = vmatpush.msra.mxu0 %v2059
    %2278 = vmatpush.msra.mxu0 %v2058
    %2279 = vmatpush.msra.mxu0 %v2057
    %2280 = vmatpush.msra.mxu0 %v2056
    %2281 = vmatpush.msra.mxu0 %v2055
    %2282 = vmatpush.msra.mxu0 %v2054
    %2283 = vmatpush.msra.mxu0 %v2053
    %2284 = vmatpush.msra.mxu0 %v2052
    %2285 = vmatpush.msra.mxu0 %v2051
    %2286 = vmatpush.msra.mxu0 %v2050
    %2287 = vmatpush.msra.mxu0 %v2049
    %2288 = vmatpush.msra.mxu0 %v2048
    %2289 = vmatpush.msra.mxu0 %v2047
    %2290 = vmatpush.msra.mxu0 %v2046
    %2291 = vmatpush.msra.mxu0 %v2045
    %2292 = vmatpush.msra.mxu0 %v2044
    %2293 = vmatmul.f32.gmra.mxu0 %v2107
    %v2294 = vpop.f32.mrf.mxu0
    %v2295 = vadd.f32 %v2272, %v2294
    %2296 = vmatmul.f32.gmra.mxu0 %v2115
    %v2297 = vpop.f32.mrf.mxu0
    %v2298 = vadd.f32 %v2275, %v2297
    %2299 = vdwg.mxu0
    %2302 = vrot.lane.b32.xlu0 %v2295, 40
    %v2303 = vpop.permute.xlu0 %2302
    %2304 = vrot.lane.b32.xlu0 %v2298, 40
    %v2305 = vpop.permute.xlu0 %2304
    %vm2308 = vcmask 392512
    %2309 = vst.msk [vmem:[#allocation2] sm:$0xff] %vm2308, %v2303
    %2310 = vst.msk [vmem:[#allocation2 + $0x8] sm:$0xff] %vm2308, %v2305
    %v2311 = vld [vmem:[%s1] sm:$0xff]
    %v2312 = vld [vmem:[%s1 + $0x8] sm:$0xff]
    %v2313 = vld [vmem:[%s2] sm:$0xff]
    %v2314 = vld [vmem:[%s0] sm:$0xff]
    %v2315 = vld [vmem:[%s0 + $0x8] sm:$0xff]
    %2316 = vset.pattern.permute.xlu0 0
    %2317 = vperm.xlu0 %2316, %v2314
    %v2318 = vpop.permute.xlu0 %2317
    %2319 = vset.pattern.permute.xlu0 0
    %2320 = vperm.xlu0 %2319, %v2315
    %v2321 = vpop.permute.xlu0 %2320
    %vm2322 = vcmp.eq.s32.totalorder %v2318, %v167
    %vm2323 = vcmp.eq.s32.totalorder %v2321, %v167
    %v2324 = vsel %vm2322, 1, 0
    %v2325 = vsel %vm2323, 1, 0
    %v2326 = vcvt.s32.f32 %v2324
    %v2327 = vcvt.s32.f32 %v2325
    %v2329 = vsel %vm413, %v2326, 0
    %v2332 = vsel %vm413, %v2327, 0
    %2334 = vmatpush.msra.mxu0 0.0
    %2335 = vmatpush.msra.mxu0 0.0
    %2336 = vmatpush.msra.mxu0 0.0
    %2337 = vmatpush.msra.mxu0 0.0
    %2338 = vmatpush.msra.mxu0 0.0
    %2339 = vmatpush.msra.mxu0 0.0
    %2340 = vmatpush.msra.mxu0 0.0
    %2341 = vmatpush.msra.mxu0 0.0
    %2342 = vmatpush.msra.mxu0 0.0
    %2343 = vmatpush.msra.mxu0 0.0
    %2344 = vmatpush.msra.mxu0 0.0
    %2345 = vmatpush.msra.mxu0 0.0
    %2346 = vmatpush.msra.mxu0 0.0
    %2347 = vmatpush.msra.mxu0 0.0
    %2348 = vmatpush.msra.mxu0 0.0
    %2349 = vmatpush.msra.mxu0 %v2313
    %2350 = vmatmul.f32.gmra.mxu0 %v2329
    %v2351 = vpop.f32.mrf.mxu0
    %v2352 = vadd.f32 0.0, %v2351
    %2353 = vmatmul.f32.gmra.mxu0 %v2332
    %v2354 = vpop.f32.mrf.mxu0
    %v2355 = vadd.f32 0.0, %v2354
    %2356 = vdwg.mxu0
    %v2357 = vadd.f32 %v2311, %v2352
    %v2358 = vadd.f32 %v2312, %v2355
    %v2359 = vld [vmem:[%s3] sm:$0xff]
    %v2360 = vld [vmem:[%s3 + $0x8] sm:$0xff]
    %v2361 = vld [vmem:[%s3 + $0x10] sm:$0xff]
    %v2362 = vld [vmem:[%s3 + $0x18] sm:$0xff]
    %2363 = vset.pattern.permute.xlu0 1
    %2364 = vperm.xlu0 %2363, %v2314
    %v2365 = vpop.permute.xlu0 %2364
    %2366 = vset.pattern.permute.xlu0 1
    %2367 = vperm.xlu0 %2366, %v2315
    %v2368 = vpop.permute.xlu0 %2367
    %vm2369 = vcmp.eq.s32.totalorder %v2365, %v167
    %vm2370 = vcmp.eq.s32.totalorder %v2368, %v167
    %v2371 = vsel %vm2369, 1, 0
    %v2372 = vsel %vm2370, 1, 0
    %v2373 = vcvt.s32.f32 %v2371
    %v2374 = vcvt.s32.f32 %v2372
    %vm2375 = vcmask 261120
    %v2377 = vsel %vm2375, %v2373, 0
    %v2380 = vsel %vm2375, %v2374, 0
    %2382 = vmatpush.msra.mxu0 0.0
    %2383 = vmatpush.msra.mxu0 0.0
    %2384 = vmatpush.msra.mxu0 0.0
    %2385 = vmatpush.msra.mxu0 0.0
    %2386 = vmatpush.msra.mxu0 0.0
    %2387 = vmatpush.msra.mxu0 0.0
    %2388 = vmatpush.msra.mxu0 0.0
    %2389 = vmatpush.msra.mxu0 0.0
    %2390 = vmatpush.msra.mxu0 0.0
    %2391 = vmatpush.msra.mxu0 0.0
    %2392 = vmatpush.msra.mxu0 0.0
    %2393 = vmatpush.msra.mxu0 0.0
    %2394 = vmatpush.msra.mxu0 %v2362
    %2395 = vmatpush.msra.mxu0 %v2361
    %2396 = vmatpush.msra.mxu0 %v2360
    %2397 = vmatpush.msra.mxu0 %v2359
    %2398 = vmatmul.f32.gmra.mxu0 %v2377
    %v2399 = vpop.f32.mrf.mxu0
    %v2400 = vadd.f32 0.0, %v2399
    %2401 = vmatmul.f32.gmra.mxu0 %v2380
    %v2402 = vpop.f32.mrf.mxu0
    %v2403 = vadd.f32 0.0, %v2402
    %2404 = vdwg.mxu0
    %v2405 = vadd.f32 %v2357, %v2400
    %v2406 = vadd.f32 %v2358, %v2403
    %v2407 = vld [vmem:[#allocation2] sm:$0xff]
    %v2408 = vld [vmem:[#allocation2 + $0x8] sm:$0xff]
    %v2409 = vadd.f32 %v2405, %v2407
    %v2410 = vadd.f32 %v2406, %v2408
    %vm2411 = vcmask 392192
    %v2412 = vsel %vm2411, %v2409, 0.0
    %2413 = vadd.xlane.f32.xlu0 %v2412
    %v2414 = vpop.xlane.xlu0 %2413
    %v2415 = vsel %vm2411, %v2410, 0.0
    %2416 = vadd.xlane.f32.xlu0 %v2415
    %v2417 = vpop.xlane.xlu0 %2416
    %v2418 = vrcp.pop 48.0
    %v2419 = vmul.f32 48.0, %v2418
    %v2420 = vsub.f32 1.0, %v2419
    %v2421 = vmul.f32 %v2418, %v2420
    %v2422 = vadd.f32 %v2418, %v2421
    %vm2423 = vweird.f32 %v2418
    %v2424 = vsel %vm2423, %v2418, %v2422
    %v2425 = vmul.f32 %v2414, %v2424
    %v2426 = vmul.f32 %v2417, %v2424
    %v2427 = vsub.f32 %v2409, %v2425
    %v2428 = vsub.f32 %v2410, %v2426
    %v2429 = vmul.f32 %v2427, %v2427
    %v2430 = vmul.f32 %v2428, %v2428
    %v2431 = vsel %vm2411, %v2429, 0.0
    %2432 = vadd.xlane.f32.xlu0 %v2431
    %v2433 = vpop.xlane.xlu0 %2432
    %v2434 = vsel %vm2411, %v2430, 0.0
    %2435 = vadd.xlane.f32.xlu0 %v2434
    %v2436 = vpop.xlane.xlu0 %2435
    %v2437 = vmul.f32 %v2433, %v2424
    %v2438 = vmul.f32 %v2436, %v2424
    %v2439 = vadd.f32 %v2437, 1e-05
    %v2440 = vadd.f32 %v2438, 1e-05
    %v2441 = vrsqrt.pop %v2439
    %v2442 = vmul.f32 %v2441, %v2439
    %v2443 = vmul.f32 %v2442, %v2441
    %v2444 = vmul.f32 0.5, %v2443
    %v2445 = vsub.f32 1.5, %v2444
    %v2446 = vmul.f32 %v2441, %v2445
    %vm2447 = vweird.f32 %v2439
    %vm2448 = vweird.f32 %v2441
    %vm2449 = vmor %vm2447, %vm2448
    %v2450 = vsel %vm2449, %v2441, %v2446
    %v2451 = vrsqrt.pop %v2440
    %v2452 = vmul.f32 %v2451, %v2440
    %v2453 = vmul.f32 %v2452, %v2451
    %v2454 = vmul.f32 0.5, %v2453
    %v2455 = vsub.f32 1.5, %v2454
    %v2456 = vmul.f32 %v2451, %v2455
    %vm2457 = vweird.f32 %v2440
    %vm2458 = vweird.f32 %v2451
    %vm2459 = vmor %vm2457, %vm2458
    %v2460 = vsel %vm2459, %v2451, %v2456
    %v2461 = vmul.f32 %v2427, %v2450
    %v2462 = vmul.f32 %v2428, %v2460
    %v2463 = vld [vmem:[%s8] sm:$0x1]
    %v2465 = vperm.slane %v2463, 0
    %v2467 = vmul.f32 %v2461, %v2465
    %v2468 = vmul.f32 %v2462, %v2465
    %v2469 = vld [vmem:[%s9] sm:$0x1]
    %v2471 = vperm.slane %v2469, 0
    %v2473 = vadd.f32 %v2467, %v2471
    %v2474 = vadd.f32 %v2468, %v2471
    %2475 = vst.msk [vmem:[#allocation3] sm:$0xff] %vm2411, %v2473
    %2476 = vst.msk [vmem:[#allocation3 + $0x8] sm:$0xff] %vm2411, %v2474
    // Predicated region
    $region42: #{layoutlmv3_text_embeddings.1} parent=1 // pred_check
      _
    $region43: #{layoutlmv3_text_embeddings.1} parent=1 // pred_check_branch
      %2478 = sbr.rel (0) target = $region45
    $region44: #{layoutlmv3_text_embeddings.1} parent=1 // pred_region
      %2480 = vsyncadd [#allocation4], 0
      %s2481 = sshll.u32 [#allocation3], 4
      %s2482 = int_to_ptr.vmem [resolvable:$true] %s2481
      %s2483 = sshll.u32 %s10, 4
      %s2484 = int_to_ptr.hbm [resolvable:$true] %s2483
      %2489 = dma.vmem_to_hbm [thread:$0]  %s2482, 256, %s2484, [#allocation4], 128, 128, 8
    $region45: #{layoutlmv3_text_embeddings.1} parent=1 // pred_fallthru
      _
    // Predicated region
    $region46: #{layoutlmv3_text_embeddings.1} parent=1 // pred_check
      _
    $region47: #{layoutlmv3_text_embeddings.1} parent=1 // pred_check_branch
      %2491 = sbr.rel (0) target = $region49
    $region48: #{layoutlmv3_text_embeddings.1} parent=1 // pred_region
      %2493 = dma.done [#allocation4], 256
    $region49: #{layoutlmv3_text_embeddings.1} parent=1 // pred_fallthru
      _
    %2494 = vsyncpa [#allocation4], 1

</llo_original>
